<compile_context>
chip_gen: v6e
topology: v6e:2x2x1
jax: 0.10.0
libtpu: 0.0.40
codegen_flags: <defaults>
</compile_context>

<pallas_src>
import jax
import jax.numpy as jnp
from jax import lax
from jax.experimental import pallas as pl
from jax.experimental.pallas import tpu as pltpu


def _mrf_nll_kernel(phi_ref, tags_ref, psi_ut_ref, psi_pt_ref, out_ref):
    """NLL = logZ - score(T) for one lane-block of TB sentences.

    Layouts (batch on lanes, K tags on sublanes):
      phi_ref : (L, F, TB)  bf16   features, batch-last (MXU RHS per position)
      tags_ref: (L, TB)     int32  gold tags
      psi_ut  : (K, F)      bf16   transposed unary weights (MXU LHS)
      psi_pt  : (K, K)      f32    psi_pt[k, j] = psi_pair[j, k]
      out_ref : (1, 1, TB)  f32    per-sentence NLL, lane-dense
    """
    L, F, TB = phi_ref.shape
    K = psi_ut_ref.shape[0]

    psi_ut = psi_ut_ref[...]                                     # (K, F) bf16
    psi_pt = psi_pt_ref[...]                                     # (K, K) f32

    # Hoisted constants (JAX does not CSE broadcast_in_dim in the unrolled chain).
    psi_bcast = jnp.broadcast_to(psi_pt[:, :, None], (K, K, TB))  # [k_new, k_old, b]
    k_iota = lax.broadcasted_iota(jnp.int32, (K, TB), 0)          # (K, TB)

    def unary(l):
        # (K, F) @ (F, TB) on the MXU, f32 accumulation; N = TB lanes is dense.
        return jnp.dot(psi_ut, phi_ref[l], preferred_element_type=jnp.float32)

    def one_hot(l):
        return (k_iota == tags_ref[l][None, :]).astype(jnp.float32)  # (K, TB)

    u_l = unary(0)
    t_prev = one_hot(0)
    score_acc = u_l * t_prev              # (K, TB); reduced over K once at the end
    alpha = u_l                           # (K, TB) forward messages (log space)

    # TODO(synk): for long sentences (L >~ 32) switch this unrolled chain to a
    # lax.fori_loop over a VMEM scratch of unaries to bound code size.
    for l in range(1, L):
        u_l = unary(l)
        t_cur = one_hot(l)

        # gold-path pairwise potential psi_pair[T[l-1], k], selected by one-hot
        sel = jnp.sum(psi_bcast * t_prev[None, :, :], axis=1)     # (K, TB)
        score_acc = score_acc + (u_l + sel) * t_cur

        # forward recursion: s[k_new, k_old, b] = alpha[k_old, b] + psi_pair[k_old, k_new]
        s = psi_bcast + alpha[None, :, :]                         # (K, K, TB)
        m = jnp.max(s, axis=1)                                    # (K, TB)
        alpha = jnp.log(jnp.sum(jnp.exp(s - m[:, None, :]), axis=1)) + m + u_l
        t_prev = t_cur

    score = jnp.sum(score_acc, axis=0)                            # (TB,)
    m_f = jnp.max(alpha, axis=0)                                  # (TB,)
    log_z = jnp.log(jnp.sum(jnp.exp(alpha - m_f[None, :]), axis=0)) + m_f

    out_ref[...] = (log_z - score).reshape(1, 1, TB)


def _round_up(x, m):
    return ((x + m - 1) // m) * m


def _prepare(phi_b, tags_b, block_b):
    """(B, L, F) phi + (B, L) tags -> batch-last layouts padded to the grid.

    Returns phi (L, F, B_pad) bf16, tags (L, B_pad) int32, B, effective block_b.
    Either block_b is a multiple of 128 (lane-dense blocks) or there is a single
    block spanning the whole padded batch (legal full-dim block).
    """
    phi_b = jnp.asarray(phi_b)
    tags_b = jnp.asarray(tags_b, jnp.int32)
    B = phi_b.shape[0]

    if _round_up(B, 8) <= block_b:
        block_b = _round_up(B, 8)            # one block covering the whole batch
        B_pad = block_b
    else:
        block_b = _round_up(block_b, 128)    # lane-dim blocks must be x128
        G = pl.cdiv(B, block_b)
        if G >= 2 and G % 2 == 1:
            G += 1                           # even grid: both v7x TCs stay busy
        B_pad = G * block_b

    if B_pad != B:
        # zero padding produces finite (garbage) NLLs that are sliced off later
        phi_b = jnp.pad(phi_b, ((0, B_pad - B), (0, 0), (0, 0)))
        tags_b = jnp.pad(tags_b, ((0, B_pad - B), (0, 0)))

    phi_lfb = jnp.transpose(phi_b, (1, 2, 0)).astype(jnp.bfloat16)  # (L, F, B_pad)
    tags_lb = jnp.transpose(tags_b, (1, 0))                         # (L, B_pad)
    return phi_lfb, tags_lb, B, block_b


def _mrf_nll_call(phi_lfb, tags_lb, psi_unary, psi_pair, *, block_b,
                  vmem_limit_bytes=None):
    """Run the kernel on pre-laid-out inputs; returns (B_pad,) f32 NLLs."""
    L, F, B_pad = phi_lfb.shape
    K = psi_unary.shape[1]
    assert B_pad % block_b == 0
    G = B_pad // block_b

    # psi changes every call but is tiny: transpose / cast in XLA outside.
    psi_ut = jnp.asarray(psi_unary, jnp.float32).T.astype(jnp.bfloat16)  # (K, F)
    psi_pt = jnp.asarray(psi_pair, jnp.float32).T                        # (K, K)

    flops = 2 * B_pad * L * F * K + 10 * B_pad * (L - 1) * K * K
    transcendentals = B_pad * (L - 1) * (K * K + K) + 2 * B_pad * K
    bytes_accessed = (phi_lfb.size * phi_lfb.dtype.itemsize
                      + tags_lb.size * 4 + B_pad * 4
                      + psi_ut.size * 2 + psi_pt.size * 4)

    out = pl.pallas_call(
        _mrf_nll_kernel,
        out_shape=jax.ShapeDtypeStruct((G, 1, block_b), jnp.float32),
        grid_spec=pltpu.PrefetchScalarGridSpec(
            num_scalar_prefetch=0,
            grid=(G,),
            in_specs=[
                pl.BlockSpec((L, F, block_b), lambda g: (0, 0, g)),
                pl.BlockSpec((L, block_b), lambda g: (0, g)),
                pl.BlockSpec((K, F), lambda g: (0, 0)),
                pl.BlockSpec((K, K), lambda g: (0, 0)),
            ],
            out_specs=pl.BlockSpec((1, 1, block_b), lambda g: (g, 0, 0)),
        ),
        compiler_params=pltpu.CompilerParams(
            dimension_semantics=("parallel",),      # batch blocks split across TCs
            vmem_limit_bytes=vmem_limit_bytes),
        cost_estimate=pl.CostEstimate(flops=flops,
                                      transcendentals=transcendentals,
                                      bytes_accessed=bytes_accessed),
    )(phi_lfb, tags_lb, psi_ut, psi_pt)

    return out.reshape(B_pad)


def mrf_nll_batched(phi_b, tags_b, psi_unary, psi_pair, *, block_b=128,
                    vmem_limit_bytes=None):
    """Batched NLL: phi_b (B, L, F), tags_b (B, L) int -> (B,) float32."""
    phi_lfb, tags_lb, B, block_b = _prepare(phi_b, tags_b, block_b)
    nll = _mrf_nll_call(phi_lfb, tags_lb, psi_unary, psi_pair,
                        block_b=block_b, vmem_limit_bytes=vmem_limit_bytes)
    return nll[:B]


class MRFLin:
    """JAX analogue of MRF_Lin: fixed (features, tags); forward(psi) -> (1,) NLL."""

    def __init__(self, num_tags, sentence):
        self.num_tags = num_tags
        phi, tags = sentence
        phi = jnp.asarray(phi, jnp.float32)            # (L, F)
        tags = jnp.asarray(tags, jnp.int32)            # (L,)
        self.num_feats = phi.shape[1]
        # the sentence is fixed across psi updates: pre-layout (batch-last, bf16) once
        self.phi_lfb, self.tags_lb, self._b, self._block_b = _prepare(
            phi[None], tags[None], block_b=8)

    def forward(self, psi):
        F = self.num_feats
        psi = jnp.asarray(psi, jnp.float32)
        psi_unary = psi[:F, :]                         # (F, K) linear unary params
        psi_pair = psi[F:, :]                          # (K, K) transition potentials
        nll = _mrf_nll_call(self.phi_lfb, self.tags_lb, psi_unary, psi_pair,
                            block_b=self._block_b)
        return nll[:1]                                 # shape (1,), like torch.Tensor([val])

    __call__ = forward


def _reference_nll(phi, psi_unary, psi_pair, tags):
    """Pure-JAX reference for correctness checking (single sentence)."""
    L = phi.shape[0]
    U = phi @ psi_unary
    score = U[jnp.arange(L), tags].sum() + psi_pair[tags[:-1], tags[1:]].sum()
    alpha = U[0]
    for l in range(1, L):
        alpha = jax.scipy.special.logsumexp(alpha[:, None] + psi_pair, axis=0) + U[l]
    return jax.scipy.special.logsumexp(alpha) - score


if __name__ == "__main__":
    L, F, K = 8, 32, 8        # seq len, feature dim, number of tags
    B = 256                   # batch -> two lane-dense 128-sentence blocks (even grid)

    key = jax.random.PRNGKey(0)
    k_phi, k_psi, k_tags = jax.random.split(key, 3)

    phi_b = jax.random.normal(k_phi, (B, L, F), dtype=jnp.float32) * 0.5
    psi = jax.random.normal(k_psi, (F + K, K), dtype=jnp.float32) * 0.1
    tags_b = jax.random.randint(k_tags, (B, L), 0, K, dtype=jnp.int32)

    psi_unary, psi_pair = psi[:F, :], psi[F:, :]

    # --- batched path: one pallas_call, grid of 2 parallel 128-sentence blocks ---
    out_b = mrf_nll_batched(phi_b, tags_b, psi_unary, psi_pair, block_b=128)
    out_b = jax.block_until_ready(out_b)
    assert out_b.shape == (B,)

    # reference uses the same bf16-rounded MXU operands; the recursion is f32 in both
    phi_r = phi_b.astype(jnp.bfloat16).astype(jnp.float32)
    psi_u_r = psi_unary.astype(jnp.bfloat16).astype(jnp.float32)
    ref_b = jax.vmap(lambda p, t: _reference_nll(p, psi_u_r, psi_pair, t))(phi_r, tags_b)
    assert jnp.allclose(out_b, ref_b, rtol=1e-4, atol=1e-3), (
        float(jnp.max(jnp.abs(out_b - ref_b))))

    # --- module-style single-sentence path (matches MRF_Lin.forward semantics) ---
    model = MRFLin(num_tags=K, sentence=(phi_b[0], tags_b[0]))
    out = model(psi)
    out = jax.block_until_ready(out)
    assert out.shape == (1,)
    ref = _reference_nll(phi_r[0], psi_u_r, psi_pair, tags_b[0])
    assert jnp.allclose(out, jnp.asarray([ref]), rtol=1e-4, atol=1e-3), (out, ref)

    print("KERNEL_OK")
</pallas_src>

<mosaic_0001>
module attributes {stable_mosaic.version = 11 : i64} {
  func.func @_mrf_nll_kernel(%arg0: i32, %arg1: memref<8x32x128xbf16, #tpu.memory_space<vmem>>, %arg2: memref<8x128xi32, #tpu.memory_space<vmem>>, %arg3: memref<8x32xbf16, #tpu.memory_space<vmem>>, %arg4: memref<8x8xf32, #tpu.memory_space<vmem>>, %arg5: memref<1x1x128xf32, #tpu.memory_space<vmem>>) attributes {dimension_semantics = [#tpu.dimension_semantics<parallel>], iteration_bounds = array<i64: 2>, scalar_prefetch = 0 : i64, scratch_operands = 0 : i64, tpu.core_type = #tpu.core_type<tc>, window_params = [{transform_indices = @transform_0, window_bounds = array<i64: 8, 32, 128>}, {transform_indices = @transform_1, window_bounds = array<i64: 8, 128>}, {pipeline_mode = #tpu.pipeline_mode<synchronous>, transform_indices = @transform_2, window_bounds = array<i64: 8, 32>}, {pipeline_mode = #tpu.pipeline_mode<synchronous>, transform_indices = @transform_3, window_bounds = array<i64: 8, 8>}, {transform_indices = @transform_4, window_bounds = array<i64: 1, 1, 128>}]} {
    %c0 = arith.constant 0 : index
    %c0_0 = arith.constant 0 : index
    %0 = vector.load %arg3[%c0, %c0_0] : memref<8x32xbf16, #tpu.memory_space<vmem>>, vector<8x32xbf16>
    %c0_1 = arith.constant 0 : index
    %c0_2 = arith.constant 0 : index
    %1 = vector.load %arg4[%c0_1, %c0_2] : memref<8x8xf32, #tpu.memory_space<vmem>>, vector<8x8xf32>
    %2 = vector.shape_cast %1 : vector<8x8xf32> to vector<8x8x1xf32>
    %3 = vector.shape_cast %2 : vector<8x8x1xf32> to vector<8x8x1xf32>
    %4 = vector.broadcast %3 : vector<8x8x1xf32> to vector<8x8x128xf32>
    %5 = tpu.iota {dimensions = array<i32: 0>} : vector<8x128xi32>
    %c0_3 = arith.constant 0 : index
    %c0_4 = arith.constant 0 : index
    %c0_5 = arith.constant 0 : index
    %6 = vector.load %arg1[%c0_3, %c0_4, %c0_5] : memref<8x32x128xbf16, #tpu.memory_space<vmem>>, vector<1x32x128xbf16>
    %7 = vector.shape_cast %6 : vector<1x32x128xbf16> to vector<32x128xbf16>
    %cst = arith.constant dense<0.000000e+00> : vector<8x128xf32>
    %8 = tpu.matmul %0, %7, %cst {dimension_numbers = #tpu.dot_dimension_numbers<[1], [0], [0], [1], [0, 0, 1, 1], [], []>} : vector<8x32xbf16>, vector<32x128xbf16>, vector<8x128xf32> -> vector<8x128xf32>
    %c0_6 = arith.constant 0 : index
    %c0_7 = arith.constant 0 : index
    %9 = vector.load %arg2[%c0_6, %c0_7] : memref<8x128xi32, #tpu.memory_space<vmem>>, vector<1x128xi32>
    %10 = vector.shape_cast %9 : vector<1x128xi32> to vector<128xi32>
    %11 = vector.shape_cast %10 : vector<128xi32> to vector<1x128xi32>
    %12 = vector.broadcast %11 : vector<1x128xi32> to vector<8x128xi32>
    %13 = arith.cmpi eq, %5, %12 : vector<8x128xi32>
    %14 = arith.extui %13 : vector<8x128xi1> to vector<8x128xi32>
    %15 = arith.sitofp %14 : vector<8x128xi32> to vector<8x128xf32>
    %16 = arith.mulf %8, %15 : vector<8x128xf32>
    %c1 = arith.constant 1 : index
    %c0_8 = arith.constant 0 : index
    %c0_9 = arith.constant 0 : index
    %17 = vector.load %arg1[%c1, %c0_8, %c0_9] : memref<8x32x128xbf16, #tpu.memory_space<vmem>>, vector<1x32x128xbf16>
    %18 = vector.shape_cast %17 : vector<1x32x128xbf16> to vector<32x128xbf16>
    %cst_10 = arith.constant dense<0.000000e+00> : vector<8x128xf32>
    %19 = tpu.matmul %0, %18, %cst_10 {dimension_numbers = #tpu.dot_dimension_numbers<[1], [0], [0], [1], [0, 0, 1, 1], [], []>} : vector<8x32xbf16>, vector<32x128xbf16>, vector<8x128xf32> -> vector<8x128xf32>
    %c1_11 = arith.constant 1 : index
    %c0_12 = arith.constant 0 : index
    %20 = vector.load %arg2[%c1_11, %c0_12] : memref<8x128xi32, #tpu.memory_space<vmem>>, vector<1x128xi32>
    %21 = vector.shape_cast %20 : vector<1x128xi32> to vector<128xi32>
    %22 = vector.shape_cast %21 : vector<128xi32> to vector<1x128xi32>
    %23 = vector.broadcast %22 : vector<1x128xi32> to vector<8x128xi32>
    %24 = arith.cmpi eq, %5, %23 : vector<8x128xi32>
    %25 = arith.extui %24 : vector<8x128xi1> to vector<8x128xi32>
    %26 = arith.sitofp %25 : vector<8x128xi32> to vector<8x128xf32>
    %27 = vector.shape_cast %15 : vector<8x128xf32> to vector<1x8x128xf32>
    %28 = vector.broadcast %27 : vector<1x8x128xf32> to vector<8x8x128xf32>
    %29 = arith.mulf %4, %28 : vector<8x8x128xf32>
    %cst_13 = arith.constant dense<0.000000e+00> : vector<8x128xf32>
    %30 = vector.multi_reduction <add>, %29, %cst_13 [1] : vector<8x8x128xf32> to vector<8x128xf32>
    %31 = arith.addf %19, %30 : vector<8x128xf32>
    %32 = arith.mulf %31, %26 : vector<8x128xf32>
    %33 = arith.addf %16, %32 : vector<8x128xf32>
    %34 = vector.shape_cast %8 : vector<8x128xf32> to vector<1x8x128xf32>
    %35 = vector.broadcast %34 : vector<1x8x128xf32> to vector<8x8x128xf32>
    %36 = arith.addf %4, %35 : vector<8x8x128xf32>
    %cst_14 = arith.constant dense<0xFF800000> : vector<8x128xf32>
    %37 = vector.multi_reduction <maximumf>, %36, %cst_14 [1] : vector<8x8x128xf32> to vector<8x128xf32>
    %38 = vector.shape_cast %37 : vector<8x128xf32> to vector<8x1x128xf32>
    %39 = vector.broadcast %38 : vector<8x1x128xf32> to vector<8x8x128xf32>
    %40 = arith.subf %36, %39 : vector<8x8x128xf32>
    %41 = math.exp %40 : vector<8x8x128xf32>
    %cst_15 = arith.constant dense<0.000000e+00> : vector<8x128xf32>
    %42 = vector.multi_reduction <add>, %41, %cst_15 [1] : vector<8x8x128xf32> to vector<8x128xf32>
    %43 = math.log %42 : vector<8x128xf32>
    %44 = arith.addf %43, %37 : vector<8x128xf32>
    %45 = arith.addf %44, %19 : vector<8x128xf32>
    %c2 = arith.constant 2 : index
    %c0_16 = arith.constant 0 : index
    %c0_17 = arith.constant 0 : index
    %46 = vector.load %arg1[%c2, %c0_16, %c0_17] : memref<8x32x128xbf16, #tpu.memory_space<vmem>>, vector<1x32x128xbf16>
    %47 = vector.shape_cast %46 : vector<1x32x128xbf16> to vector<32x128xbf16>
    %cst_18 = arith.constant dense<0.000000e+00> : vector<8x128xf32>
    %48 = tpu.matmul %0, %47, %cst_18 {dimension_numbers = #tpu.dot_dimension_numbers<[1], [0], [0], [1], [0, 0, 1, 1], [], []>} : vector<8x32xbf16>, vector<32x128xbf16>, vector<8x128xf32> -> vector<8x128xf32>
    %c2_19 = arith.constant 2 : index
    %c0_20 = arith.constant 0 : index
    %49 = vector.load %arg2[%c2_19, %c0_20] : memref<8x128xi32, #tpu.memory_space<vmem>>, vector<1x128xi32>
    %50 = vector.shape_cast %49 : vector<1x128xi32> to vector<128xi32>
    %51 = vector.shape_cast %50 : vector<128xi32> to vector<1x128xi32>
    %52 = vector.broadcast %51 : vector<1x128xi32> to vector<8x128xi32>
    %53 = arith.cmpi eq, %5, %52 : vector<8x128xi32>
    %54 = arith.extui %53 : vector<8x128xi1> to vector<8x128xi32>
    %55 = arith.sitofp %54 : vector<8x128xi32> to vector<8x128xf32>
    %56 = vector.shape_cast %26 : vector<8x128xf32> to vector<1x8x128xf32>
    %57 = vector.broadcast %56 : vector<1x8x128xf32> to vector<8x8x128xf32>
    %58 = arith.mulf %4, %57 : vector<8x8x128xf32>
    %cst_21 = arith.constant dense<0.000000e+00> : vector<8x128xf32>
    %59 = vector.multi_reduction <add>, %58, %cst_21 [1] : vector<8x8x128xf32> to vector<8x128xf32>
    %60 = arith.addf %48, %59 : vector<8x128xf32>
    %61 = arith.mulf %60, %55 : vector<8x128xf32>
    %62 = arith.addf %33, %61 : vector<8x128xf32>
    %63 = vector.shape_cast %45 : vector<8x128xf32> to vector<1x8x128xf32>
    %64 = vector.broadcast %63 : vector<1x8x128xf32> to vector<8x8x128xf32>
    %65 = arith.addf %4, %64 : vector<8x8x128xf32>
    %cst_22 = arith.constant dense<0xFF800000> : vector<8x128xf32>
    %66 = vector.multi_reduction <maximumf>, %65, %cst_22 [1] : vector<8x8x128xf32> to vector<8x128xf32>
    %67 = vector.shape_cast %66 : vector<8x128xf32> to vector<8x1x128xf32>
    %68 = vector.broadcast %67 : vector<8x1x128xf32> to vector<8x8x128xf32>
    %69 = arith.subf %65, %68 : vector<8x8x128xf32>
    %70 = math.exp %69 : vector<8x8x128xf32>
    %cst_23 = arith.constant dense<0.000000e+00> : vector<8x128xf32>
    %71 = vector.multi_reduction <add>, %70, %cst_23 [1] : vector<8x8x128xf32> to vector<8x128xf32>
    %72 = math.log %71 : vector<8x128xf32>
    %73 = arith.addf %72, %66 : vector<8x128xf32>
    %74 = arith.addf %73, %48 : vector<8x128xf32>
    %c3 = arith.constant 3 : index
    %c0_24 = arith.constant 0 : index
    %c0_25 = arith.constant 0 : index
    %75 = vector.load %arg1[%c3, %c0_24, %c0_25] : memref<8x32x128xbf16, #tpu.memory_space<vmem>>, vector<1x32x128xbf16>
    %76 = vector.shape_cast %75 : vector<1x32x128xbf16> to vector<32x128xbf16>
    %cst_26 = arith.constant dense<0.000000e+00> : vector<8x128xf32>
    %77 = tpu.matmul %0, %76, %cst_26 {dimension_numbers = #tpu.dot_dimension_numbers<[1], [0], [0], [1], [0, 0, 1, 1], [], []>} : vector<8x32xbf16>, vector<32x128xbf16>, vector<8x128xf32> -> vector<8x128xf32>
    %c3_27 = arith.constant 3 : index
    %c0_28 = arith.constant 0 : index
    %78 = vector.load %arg2[%c3_27, %c0_28] : memref<8x128xi32, #tpu.memory_space<vmem>>, vector<1x128xi32>
    %79 = vector.shape_cast %78 : vector<1x128xi32> to vector<128xi32>
    %80 = vector.shape_cast %79 : vector<128xi32> to vector<1x128xi32>
    %81 = vector.broadcast %80 : vector<1x128xi32> to vector<8x128xi32>
    %82 = arith.cmpi eq, %5, %81 : vector<8x128xi32>
    %83 = arith.extui %82 : vector<8x128xi1> to vector<8x128xi32>
    %84 = arith.sitofp %83 : vector<8x128xi32> to vector<8x128xf32>
    %85 = vector.shape_cast %55 : vector<8x128xf32> to vector<1x8x128xf32>
    %86 = vector.broadcast %85 : vector<1x8x128xf32> to vector<8x8x128xf32>
    %87 = arith.mulf %4, %86 : vector<8x8x128xf32>
    %cst_29 = arith.constant dense<0.000000e+00> : vector<8x128xf32>
    %88 = vector.multi_reduction <add>, %87, %cst_29 [1] : vector<8x8x128xf32> to vector<8x128xf32>
    %89 = arith.addf %77, %88 : vector<8x128xf32>
    %90 = arith.mulf %89, %84 : vector<8x128xf32>
    %91 = arith.addf %62, %90 : vector<8x128xf32>
    %92 = vector.shape_cast %74 : vector<8x128xf32> to vector<1x8x128xf32>
    %93 = vector.broadcast %92 : vector<1x8x128xf32> to vector<8x8x128xf32>
    %94 = arith.addf %4, %93 : vector<8x8x128xf32>
    %cst_30 = arith.constant dense<0xFF800000> : vector<8x128xf32>
    %95 = vector.multi_reduction <maximumf>, %94, %cst_30 [1] : vector<8x8x128xf32> to vector<8x128xf32>
    %96 = vector.shape_cast %95 : vector<8x128xf32> to vector<8x1x128xf32>
    %97 = vector.broadcast %96 : vector<8x1x128xf32> to vector<8x8x128xf32>
    %98 = arith.subf %94, %97 : vector<8x8x128xf32>
    %99 = math.exp %98 : vector<8x8x128xf32>
    %cst_31 = arith.constant dense<0.000000e+00> : vector<8x128xf32>
    %100 = vector.multi_reduction <add>, %99, %cst_31 [1] : vector<8x8x128xf32> to vector<8x128xf32>
    %101 = math.log %100 : vector<8x128xf32>
    %102 = arith.addf %101, %95 : vector<8x128xf32>
    %103 = arith.addf %102, %77 : vector<8x128xf32>
    %c4 = arith.constant 4 : index
    %c0_32 = arith.constant 0 : index
    %c0_33 = arith.constant 0 : index
    %104 = vector.load %arg1[%c4, %c0_32, %c0_33] : memref<8x32x128xbf16, #tpu.memory_space<vmem>>, vector<1x32x128xbf16>
    %105 = vector.shape_cast %104 : vector<1x32x128xbf16> to vector<32x128xbf16>
    %cst_34 = arith.constant dense<0.000000e+00> : vector<8x128xf32>
    %106 = tpu.matmul %0, %105, %cst_34 {dimension_numbers = #tpu.dot_dimension_numbers<[1], [0], [0], [1], [0, 0, 1, 1], [], []>} : vector<8x32xbf16>, vector<32x128xbf16>, vector<8x128xf32> -> vector<8x128xf32>
    %c4_35 = arith.constant 4 : index
    %c0_36 = arith.constant 0 : index
    %107 = vector.load %arg2[%c4_35, %c0_36] : memref<8x128xi32, #tpu.memory_space<vmem>>, vector<1x128xi32>
    %108 = vector.shape_cast %107 : vector<1x128xi32> to vector<128xi32>
    %109 = vector.shape_cast %108 : vector<128xi32> to vector<1x128xi32>
    %110 = vector.broadcast %109 : vector<1x128xi32> to vector<8x128xi32>
    %111 = arith.cmpi eq, %5, %110 : vector<8x128xi32>
    %112 = arith.extui %111 : vector<8x128xi1> to vector<8x128xi32>
    %113 = arith.sitofp %112 : vector<8x128xi32> to vector<8x128xf32>
    %114 = vector.shape_cast %84 : vector<8x128xf32> to vector<1x8x128xf32>
    %115 = vector.broadcast %114 : vector<1x8x128xf32> to vector<8x8x128xf32>
    %116 = arith.mulf %4, %115 : vector<8x8x128xf32>
    %cst_37 = arith.constant dense<0.000000e+00> : vector<8x128xf32>
    %117 = vector.multi_reduction <add>, %116, %cst_37 [1] : vector<8x8x128xf32> to vector<8x128xf32>
    %118 = arith.addf %106, %117 : vector<8x128xf32>
    %119 = arith.mulf %118, %113 : vector<8x128xf32>
    %120 = arith.addf %91, %119 : vector<8x128xf32>
    %121 = vector.shape_cast %103 : vector<8x128xf32> to vector<1x8x128xf32>
    %122 = vector.broadcast %121 : vector<1x8x128xf32> to vector<8x8x128xf32>
    %123 = arith.addf %4, %122 : vector<8x8x128xf32>
    %cst_38 = arith.constant dense<0xFF800000> : vector<8x128xf32>
    %124 = vector.multi_reduction <maximumf>, %123, %cst_38 [1] : vector<8x8x128xf32> to vector<8x128xf32>
    %125 = vector.shape_cast %124 : vector<8x128xf32> to vector<8x1x128xf32>
    %126 = vector.broadcast %125 : vector<8x1x128xf32> to vector<8x8x128xf32>
    %127 = arith.subf %123, %126 : vector<8x8x128xf32>
    %128 = math.exp %127 : vector<8x8x128xf32>
    %cst_39 = arith.constant dense<0.000000e+00> : vector<8x128xf32>
    %129 = vector.multi_reduction <add>, %128, %cst_39 [1] : vector<8x8x128xf32> to vector<8x128xf32>
    %130 = math.log %129 : vector<8x128xf32>
    %131 = arith.addf %130, %124 : vector<8x128xf32>
    %132 = arith.addf %131, %106 : vector<8x128xf32>
    %c5 = arith.constant 5 : index
    %c0_40 = arith.constant 0 : index
    %c0_41 = arith.constant 0 : index
    %133 = vector.load %arg1[%c5, %c0_40, %c0_41] : memref<8x32x128xbf16, #tpu.memory_space<vmem>>, vector<1x32x128xbf16>
    %134 = vector.shape_cast %133 : vector<1x32x128xbf16> to vector<32x128xbf16>
    %cst_42 = arith.constant dense<0.000000e+00> : vector<8x128xf32>
    %135 = tpu.matmul %0, %134, %cst_42 {dimension_numbers = #tpu.dot_dimension_numbers<[1], [0], [0], [1], [0, 0, 1, 1], [], []>} : vector<8x32xbf16>, vector<32x128xbf16>, vector<8x128xf32> -> vector<8x128xf32>
    %c5_43 = arith.constant 5 : index
    %c0_44 = arith.constant 0 : index
    %136 = vector.load %arg2[%c5_43, %c0_44] : memref<8x128xi32, #tpu.memory_space<vmem>>, vector<1x128xi32>
    %137 = vector.shape_cast %136 : vector<1x128xi32> to vector<128xi32>
    %138 = vector.shape_cast %137 : vector<128xi32> to vector<1x128xi32>
    %139 = vector.broadcast %138 : vector<1x128xi32> to vector<8x128xi32>
    %140 = arith.cmpi eq, %5, %139 : vector<8x128xi32>
    %141 = arith.extui %140 : vector<8x128xi1> to vector<8x128xi32>
    %142 = arith.sitofp %141 : vector<8x128xi32> to vector<8x128xf32>
    %143 = vector.shape_cast %113 : vector<8x128xf32> to vector<1x8x128xf32>
    %144 = vector.broadcast %143 : vector<1x8x128xf32> to vector<8x8x128xf32>
    %145 = arith.mulf %4, %144 : vector<8x8x128xf32>
    %cst_45 = arith.constant dense<0.000000e+00> : vector<8x128xf32>
    %146 = vector.multi_reduction <add>, %145, %cst_45 [1] : vector<8x8x128xf32> to vector<8x128xf32>
    %147 = arith.addf %135, %146 : vector<8x128xf32>
    %148 = arith.mulf %147, %142 : vector<8x128xf32>
    %149 = arith.addf %120, %148 : vector<8x128xf32>
    %150 = vector.shape_cast %132 : vector<8x128xf32> to vector<1x8x128xf32>
    %151 = vector.broadcast %150 : vector<1x8x128xf32> to vector<8x8x128xf32>
    %152 = arith.addf %4, %151 : vector<8x8x128xf32>
    %cst_46 = arith.constant dense<0xFF800000> : vector<8x128xf32>
    %153 = vector.multi_reduction <maximumf>, %152, %cst_46 [1] : vector<8x8x128xf32> to vector<8x128xf32>
    %154 = vector.shape_cast %153 : vector<8x128xf32> to vector<8x1x128xf32>
    %155 = vector.broadcast %154 : vector<8x1x128xf32> to vector<8x8x128xf32>
    %156 = arith.subf %152, %155 : vector<8x8x128xf32>
    %157 = math.exp %156 : vector<8x8x128xf32>
    %cst_47 = arith.constant dense<0.000000e+00> : vector<8x128xf32>
    %158 = vector.multi_reduction <add>, %157, %cst_47 [1] : vector<8x8x128xf32> to vector<8x128xf32>
    %159 = math.log %158 : vector<8x128xf32>
    %160 = arith.addf %159, %153 : vector<8x128xf32>
    %161 = arith.addf %160, %135 : vector<8x128xf32>
    %c6 = arith.constant 6 : index
    %c0_48 = arith.constant 0 : index
    %c0_49 = arith.constant 0 : index
    %162 = vector.load %arg1[%c6, %c0_48, %c0_49] : memref<8x32x128xbf16, #tpu.memory_space<vmem>>, vector<1x32x128xbf16>
    %163 = vector.shape_cast %162 : vector<1x32x128xbf16> to vector<32x128xbf16>
    %cst_50 = arith.constant dense<0.000000e+00> : vector<8x128xf32>
    %164 = tpu.matmul %0, %163, %cst_50 {dimension_numbers = #tpu.dot_dimension_numbers<[1], [0], [0], [1], [0, 0, 1, 1], [], []>} : vector<8x32xbf16>, vector<32x128xbf16>, vector<8x128xf32> -> vector<8x128xf32>
    %c6_51 = arith.constant 6 : index
    %c0_52 = arith.constant 0 : index
    %165 = vector.load %arg2[%c6_51, %c0_52] : memref<8x128xi32, #tpu.memory_space<vmem>>, vector<1x128xi32>
    %166 = vector.shape_cast %165 : vector<1x128xi32> to vector<128xi32>
    %167 = vector.shape_cast %166 : vector<128xi32> to vector<1x128xi32>
    %168 = vector.broadcast %167 : vector<1x128xi32> to vector<8x128xi32>
    %169 = arith.cmpi eq, %5, %168 : vector<8x128xi32>
    %170 = arith.extui %169 : vector<8x128xi1> to vector<8x128xi32>
    %171 = arith.sitofp %170 : vector<8x128xi32> to vector<8x128xf32>
    %172 = vector.shape_cast %142 : vector<8x128xf32> to vector<1x8x128xf32>
    %173 = vector.broadcast %172 : vector<1x8x128xf32> to vector<8x8x128xf32>
    %174 = arith.mulf %4, %173 : vector<8x8x128xf32>
    %cst_53 = arith.constant dense<0.000000e+00> : vector<8x128xf32>
    %175 = vector.multi_reduction <add>, %174, %cst_53 [1] : vector<8x8x128xf32> to vector<8x128xf32>
    %176 = arith.addf %164, %175 : vector<8x128xf32>
    %177 = arith.mulf %176, %171 : vector<8x128xf32>
    %178 = arith.addf %149, %177 : vector<8x128xf32>
    %179 = vector.shape_cast %161 : vector<8x128xf32> to vector<1x8x128xf32>
    %180 = vector.broadcast %179 : vector<1x8x128xf32> to vector<8x8x128xf32>
    %181 = arith.addf %4, %180 : vector<8x8x128xf32>
    %cst_54 = arith.constant dense<0xFF800000> : vector<8x128xf32>
    %182 = vector.multi_reduction <maximumf>, %181, %cst_54 [1] : vector<8x8x128xf32> to vector<8x128xf32>
    %183 = vector.shape_cast %182 : vector<8x128xf32> to vector<8x1x128xf32>
    %184 = vector.broadcast %183 : vector<8x1x128xf32> to vector<8x8x128xf32>
    %185 = arith.subf %181, %184 : vector<8x8x128xf32>
    %186 = math.exp %185 : vector<8x8x128xf32>
    %cst_55 = arith.constant dense<0.000000e+00> : vector<8x128xf32>
    %187 = vector.multi_reduction <add>, %186, %cst_55 [1] : vector<8x8x128xf32> to vector<8x128xf32>
    %188 = math.log %187 : vector<8x128xf32>
    %189 = arith.addf %188, %182 : vector<8x128xf32>
    %190 = arith.addf %189, %164 : vector<8x128xf32>
    %c7 = arith.constant 7 : index
    %c0_56 = arith.constant 0 : index
    %c0_57 = arith.constant 0 : index
    %191 = vector.load %arg1[%c7, %c0_56, %c0_57] : memref<8x32x128xbf16, #tpu.memory_space<vmem>>, vector<1x32x128xbf16>
    %192 = vector.shape_cast %191 : vector<1x32x128xbf16> to vector<32x128xbf16>
    %cst_58 = arith.constant dense<0.000000e+00> : vector<8x128xf32>
    %193 = tpu.matmul %0, %192, %cst_58 {dimension_numbers = #tpu.dot_dimension_numbers<[1], [0], [0], [1], [0, 0, 1, 1], [], []>} : vector<8x32xbf16>, vector<32x128xbf16>, vector<8x128xf32> -> vector<8x128xf32>
    %c7_59 = arith.constant 7 : index
    %c0_60 = arith.constant 0 : index
    %194 = vector.load %arg2[%c7_59, %c0_60] : memref<8x128xi32, #tpu.memory_space<vmem>>, vector<1x128xi32>
    %195 = vector.shape_cast %194 : vector<1x128xi32> to vector<128xi32>
    %196 = vector.shape_cast %195 : vector<128xi32> to vector<1x128xi32>
    %197 = vector.broadcast %196 : vector<1x128xi32> to vector<8x128xi32>
    %198 = arith.cmpi eq, %5, %197 : vector<8x128xi32>
    %199 = arith.extui %198 : vector<8x128xi1> to vector<8x128xi32>
    %200 = arith.sitofp %199 : vector<8x128xi32> to vector<8x128xf32>
    %201 = vector.shape_cast %171 : vector<8x128xf32> to vector<1x8x128xf32>
    %202 = vector.broadcast %201 : vector<1x8x128xf32> to vector<8x8x128xf32>
    %203 = arith.mulf %4, %202 : vector<8x8x128xf32>
    %cst_61 = arith.constant dense<0.000000e+00> : vector<8x128xf32>
    %204 = vector.multi_reduction <add>, %203, %cst_61 [1] : vector<8x8x128xf32> to vector<8x128xf32>
    %205 = arith.addf %193, %204 : vector<8x128xf32>
    %206 = arith.mulf %205, %200 : vector<8x128xf32>
    %207 = arith.addf %178, %206 : vector<8x128xf32>
    %208 = vector.shape_cast %190 : vector<8x128xf32> to vector<1x8x128xf32>
    %209 = vector.broadcast %208 : vector<1x8x128xf32> to vector<8x8x128xf32>
    %210 = arith.addf %4, %209 : vector<8x8x128xf32>
    %cst_62 = arith.constant dense<0xFF800000> : vector<8x128xf32>
    %211 = vector.multi_reduction <maximumf>, %210, %cst_62 [1] : vector<8x8x128xf32> to vector<8x128xf32>
    %212 = vector.shape_cast %211 : vector<8x128xf32> to vector<8x1x128xf32>
    %213 = vector.broadcast %212 : vector<8x1x128xf32> to vector<8x8x128xf32>
    %214 = arith.subf %210, %213 : vector<8x8x128xf32>
    %215 = math.exp %214 : vector<8x8x128xf32>
    %cst_63 = arith.constant dense<0.000000e+00> : vector<8x128xf32>
    %216 = vector.multi_reduction <add>, %215, %cst_63 [1] : vector<8x8x128xf32> to vector<8x128xf32>
    %217 = math.log %216 : vector<8x128xf32>
    %218 = arith.addf %217, %211 : vector<8x128xf32>
    %219 = arith.addf %218, %193 : vector<8x128xf32>
    %cst_64 = arith.constant dense<0.000000e+00> : vector<128xf32>
    %220 = vector.multi_reduction <add>, %207, %cst_64 [0] : vector<8x128xf32> to vector<128xf32>
    %cst_65 = arith.constant dense<0xFF800000> : vector<128xf32>
    %221 = vector.multi_reduction <maximumf>, %219, %cst_65 [0] : vector<8x128xf32> to vector<128xf32>
    %222 = vector.shape_cast %221 : vector<128xf32> to vector<1x128xf32>
    %223 = vector.broadcast %222 : vector<1x128xf32> to vector<8x128xf32>
    %224 = arith.subf %219, %223 : vector<8x128xf32>
    %225 = math.exp %224 : vector<8x128xf32>
    %cst_66 = arith.constant dense<0.000000e+00> : vector<128xf32>
    %226 = vector.multi_reduction <add>, %225, %cst_66 [0] : vector<8x128xf32> to vector<128xf32>
    %227 = math.log %226 : vector<128xf32>
    %228 = arith.addf %227, %221 : vector<128xf32>
    %229 = arith.subf %228, %220 : vector<128xf32>
    %230 = vector.shape_cast %229 : vector<128xf32> to vector<1x1x128xf32>
    %c0_67 = arith.constant 0 : index
    %c0_68 = arith.constant 0 : index
    %c0_69 = arith.constant 0 : index
    %231 = vector.load %arg5[%c0_67, %c0_68, %c0_69] : memref<1x1x128xf32, #tpu.memory_space<vmem>>, vector<1x1x128xf32>
    tpu.vector_store %arg5[%c0_67, %c0_68, %c0_69], %230 {strides = array<i32>} : memref<1x1x128xf32, #tpu.memory_space<vmem>>, vector<1x1x128xf32>,
    return
  }
  func.func @transform_0(%arg0: i32) -> (i32, i32, i32) {
    %c0_i32 = arith.constant 0 : i32
    %c0_i32_0 = arith.constant 0 : i32
    %c0_i32_1 = arith.constant 0 : i32
    return %c0_i32, %c0_i32_0, %arg0 : i32, i32, i32
  }
  func.func @transform_1(%arg0: i32) -> (i32, i32) {
    %c0_i32 = arith.constant 0 : i32
    %c0_i32_0 = arith.constant 0 : i32
    return %c0_i32, %arg0 : i32, i32
  }
  func.func @transform_2(%arg0: i32) -> (i32, i32) {
    %c0_i32 = arith.constant 0 : i32
    %c0_i32_0 = arith.constant 0 : i32
    %c0_i32_1 = arith.constant 0 : i32
    return %c0_i32, %c0_i32_0 : i32, i32
  }
  func.func @transform_3(%arg0: i32) -> (i32, i32) {
    %c0_i32 = arith.constant 0 : i32
    %c0_i32_0 = arith.constant 0 : i32
    %c0_i32_1 = arith.constant 0 : i32
    return %c0_i32, %c0_i32_0 : i32, i32
  }
  func.func @transform_4(%arg0: i32) -> (i32, i32, i32) {
    %c0_i32 = arith.constant 0 : i32
    %c0_i32_0 = arith.constant 0 : i32
    %c0_i32_1 = arith.constant 0 : i32
    return %arg0, %c0_i32, %c0_i32_0 : i32, i32, i32
  }
}

</mosaic_0001>

<llo_original>
// kernel: tpu_custom_call.1
$region0: #{tpu_custom_call.1}
  #allocation0 [shape = 'u32[]', space=smem, size = 0x4, offset = 0x4, fixed_abs, tag = 'smem constant byte address 0x4 - core index']
  #allocation1 [shape = 'u32[144,128]{1,0:T(1,128)}', space=vmem, size = 0x12000, scoped, tag = 'internal scratch']
  %s0 = inlined_call_operand.hbm [shape: bf16[8,32,256], index: 0, kind: input, shape index: {}]
  %s1 = inlined_call_operand.hbm [shape: s32[8,256], index: 1, kind: input, shape index: {}]
  %s2 = inlined_call_operand.hbm [shape: bf16[8,32], index: 2, kind: input, shape index: {}]
  %s3 = inlined_call_operand.hbm [shape: f32[8,8], index: 3, kind: input, shape index: {}]
  %s4 = inlined_call_operand.hbm [shape: f32[2,1,128], index: 4, kind: output, shape index: {}]
  %s5 = sld [smem:[#allocation0]]
  $region65: #{tpu_custom_call.1} parent=0
    _
  %s7 = ssub.s32 1, %s5
  %s8 = scalar_select 0, %s7, %s5
  $region1: #{tpu_custom_call.1} parent=0
    #allocation2 [shape = 'u8[131072]{0}', space=vmem, size = 0x20000, scoped, tag = 'input window, operand 0']
    #allocation3 [shape = 's32[2]{0}', space=sflag, size = 0x8, scoped, tag = 'scoped memory for tpu_custom_call.1']
    #allocation4 [shape = 's32[2]{0}', space=sflag, size = 0x8, scoped, tag = 'scoped memory for tpu_custom_call.1']
    #allocation5 [shape = 'u8[8192]{0}', space=vmem, size = 0x2000, scoped, tag = 'input window, operand 1']
    #allocation6 [shape = 's32[2]{0}', space=sflag, size = 0x8, scoped, tag = 'scoped memory for tpu_custom_call.1']
    #allocation7 [shape = 'u8[2048]{0}', space=vmem, size = 0x800, scoped, tag = 'input window, operand 2, single buffered']
    #allocation8 [shape = 'u8[4096]{0}', space=vmem, size = 0x1000, scoped, tag = 'input window, operand 3, single buffered']
    #allocation9 [shape = 's32[1]{0}', space=sflag, size = 0x4, scoped, tag = 'scoped memory for tpu_custom_call.1']
    #allocation10 [shape = 'u8[1024]{0}', space=vmem, size = 0x400, scoped, tag = 'output window, operand 0']
    %9 = vsyncpa [#allocation3], 0
    %s10 = scalar_lea.sflag [#allocation3], 1
    %11 = vsyncpa %s10, 0
    %12 = vsyncpa [#allocation6], 0
    %s13 = scalar_lea.sflag [#allocation6], 1
    %14 = vsyncpa %s13, 0
    %15 = vsyncpa [#allocation9], 0
    %16 = vsyncpa [#allocation4], 0
    %s17 = scalar_lea.sflag [#allocation4], 1
    %18 = vsyncpa %s17, 0
    loop: start=0, step=1, limit=4
    $region2: #{tpu_custom_call.1} parent=1 // loop_pre_header
      _
    $region3: #{tpu_custom_call.1} parent=1 // loop_header
      %s20 = sphi 0, %s24
      %p21 = scmp.ge.s32.totalorder %s20, 4
      %s30 = sphi 0, %s32
      %s33 = sphi 0, %s30
      %s34 = sphi 0, %s33
      %s50 = sphi 0, %s34
      %s56 = sphi 0, %s58
      %s59 = sphi 0, %s56
      %s60 = sphi 0, %s59
      %s76 = sphi 0, %s60
      %s80 = sphi 0, %s80
      %s82 = sphi 0, %s80
      %s83 = sphi 0, %s82
      %s97 = sphi 0, %s83
      %s101 = sphi 0, %s101
      %s103 = sphi 0, %s101
      %s104 = sphi 0, %s103
      %s118 = sphi 0, %s104
      %s124 = sphi 0, %s126
      %s127 = sphi 0, %s124
      %s128 = sphi 0, %s127
      %s144 = sphi 0, %s128
    $region4: #{tpu_custom_call.1} parent=1 // loop_header_branch
      %23 = sbr.rel (%p21) target = $region8
    $region5: #{tpu_custom_call.1} parent=1 // loop_body
      %s25 = ssub.s32 %s20, 1
      %s26 = ssub.s32 %s20, 2
      %s27 = sadd.s32 %s20, 1
      %s28 = ssub.s32 %s20, %s27
      %p29 = scmp.eq.s32.totalorder %s28, 0
      %s31 = sadd.s32 %s30, 1
      %s32 = scalar_select %p29, %s30, %s31
      %p35 = pneg %p29
      %p36 = scmp.eq.s32.totalorder %s20, 1
      %p37 = por %p35, %p36
      %p38 = scmp.ne.s32.totalorder %s30, %s33
      %p39 = scmp.eq.s32.totalorder %s20, 0
      %p40 = por %p38, %p39
      %p41 = scmp.ne.s32.totalorder %s30, %s33
      %p42 = scmp.eq.s32.totalorder %s25, 1
      %p43 = por %p41, %p42
      %p44 = scmp.ne.s32.totalorder %s33, %s34
      %p45 = scmp.eq.s32.totalorder %s25, 0
      %p46 = por %p44, %p45
      %p47 = scmp.ne.s32.totalorder %s33, %s34
      %p48 = scmp.eq.s32.totalorder %s26, 1
      %p49 = por %p47, %p48
      %p51 = scmp.ne.s32.totalorder %s34, %s50
      %p52 = scmp.eq.s32.totalorder %s26, 0
      %p53 = por %p51, %p52
      %s54 = ssub.s32 %s20, %s27
      %p55 = scmp.eq.s32.totalorder %s54, 0
      %s57 = sadd.s32 %s56, 1
      %s58 = scalar_select %p55, %s56, %s57
      %p61 = pneg %p55
      %p62 = scmp.eq.s32.totalorder %s20, 1
      %p63 = por %p61, %p62
      %p64 = scmp.ne.s32.totalorder %s56, %s59
      %p65 = scmp.eq.s32.totalorder %s20, 0
      %p66 = por %p64, %p65
      %p67 = scmp.ne.s32.totalorder %s56, %s59
      %p68 = scmp.eq.s32.totalorder %s25, 1
      %p69 = por %p67, %p68
      %p70 = scmp.ne.s32.totalorder %s59, %s60
      %p71 = scmp.eq.s32.totalorder %s25, 0
      %p72 = por %p70, %p71
      %p73 = scmp.ne.s32.totalorder %s59, %s60
      %p74 = scmp.eq.s32.totalorder %s26, 1
      %p75 = por %p73, %p74
      %p77 = scmp.ne.s32.totalorder %s60, %s76
      %p78 = scmp.eq.s32.totalorder %s26, 0
      %p79 = por %p77, %p78
      %s81 = sadd.s32 %s80, 1
      %p84 = scmp.eq.s32.totalorder %s20, 1
      %p85 = scmp.ne.s32.totalorder %s80, %s82
      %p86 = scmp.eq.s32.totalorder %s20, 0
      %p87 = por %p85, %p86
      %p88 = scmp.ne.s32.totalorder %s80, %s82
      %p89 = scmp.eq.s32.totalorder %s25, 1
      %p90 = por %p88, %p89
      %p91 = scmp.ne.s32.totalorder %s82, %s83
      %p92 = scmp.eq.s32.totalorder %s25, 0
      %p93 = por %p91, %p92
      %p94 = scmp.ne.s32.totalorder %s82, %s83
      %p95 = scmp.eq.s32.totalorder %s26, 1
      %p96 = por %p94, %p95
      %p98 = scmp.ne.s32.totalorder %s83, %s97
      %p99 = scmp.eq.s32.totalorder %s26, 0
      %p100 = por %p98, %p99
      %s102 = sadd.s32 %s101, 1
      %p105 = scmp.eq.s32.totalorder %s20, 1
      %p106 = scmp.ne.s32.totalorder %s101, %s103
      %p107 = scmp.eq.s32.totalorder %s20, 0
      %p108 = por %p106, %p107
      %p109 = scmp.ne.s32.totalorder %s101, %s103
      %p110 = scmp.eq.s32.totalorder %s25, 1
      %p111 = por %p109, %p110
      %p112 = scmp.ne.s32.totalorder %s103, %s104
      %p113 = scmp.eq.s32.totalorder %s25, 0
      %p114 = por %p112, %p113
      %p115 = scmp.ne.s32.totalorder %s103, %s104
      %p116 = scmp.eq.s32.totalorder %s26, 1
      %p117 = por %p115, %p116
      %p119 = scmp.ne.s32.totalorder %s104, %s118
      %p120 = scmp.eq.s32.totalorder %s26, 0
      %p121 = por %p119, %p120
      %s122 = ssub.s32 %s20, %s27
      %p123 = scmp.eq.s32.totalorder %s122, 0
      %s125 = sadd.s32 %s124, 1
      %s126 = scalar_select %p123, %s124, %s125
      %p129 = pneg %p123
      %p130 = scmp.eq.s32.totalorder %s20, 1
      %p131 = por %p129, %p130
      %p132 = scmp.ne.s32.totalorder %s124, %s127
      %p133 = scmp.eq.s32.totalorder %s20, 0
      %p134 = por %p132, %p133
      %p135 = scmp.ne.s32.totalorder %s124, %s127
      %p136 = scmp.eq.s32.totalorder %s25, 1
      %p137 = por %p135, %p136
      %p138 = scmp.ne.s32.totalorder %s127, %s128
      %p139 = scmp.eq.s32.totalorder %s25, 0
      %p140 = por %p138, %p139
      %p141 = scmp.ne.s32.totalorder %s127, %s128
      %p142 = scmp.eq.s32.totalorder %s26, 1
      %p143 = por %p141, %p142
      %p145 = scmp.ne.s32.totalorder %s128, %s144
      %p146 = scmp.eq.s32.totalorder %s26, 0
      %p147 = por %p145, %p146
      %p148 = scmp.le.s32.totalorder 1, %s20
      %p149 = scmp.lt.s32.totalorder %s20, 3
      %p150 = pnand %p148, %p149
      %p151 = pneg %p150
      // Predicated region
      $region9: #{tpu_custom_call.1} parent=5 // pred_check
        _
      $region10: #{tpu_custom_call.1} parent=5 // pred_check_branch
        %153 = sbr.rel (%p150) target = $region12
      $region11: #{tpu_custom_call.1} parent=5 // pred_region
        %s154 = ssub.s32 %s20, 1
        // Predicated region
        $region13: #{tpu_custom_call.1} parent=11 // pred_check
          %p155 = pneg %p93
        $region14: #{tpu_custom_call.1} parent=11 // pred_check_branch
          %157 = sbr.rel (%p155) target = $region16
        $region15: #{tpu_custom_call.1} parent=11 // pred_region
          %s159 = ssub.s32 64, 64
          %160 = vsyncadd [#allocation6], %s159
          %s162 = sshll.u32 [#allocation7], 4
          %s163 = int_to_ptr.vmem [resolvable:$true] %s162
          %165 = dma.hbm_to_vmem [thread:$0]  %s2, 64, %s163, [#allocation6]
        $region16: #{tpu_custom_call.1} parent=11 // pred_fallthru
          _
        // Predicated region
        $region17: #{tpu_custom_call.1} parent=11 // pred_check
          %p166 = pneg %p114
        $region18: #{tpu_custom_call.1} parent=11 // pred_check_branch
          %168 = sbr.rel (%p166) target = $region20
        $region19: #{tpu_custom_call.1} parent=11 // pred_region
          %s170 = ssub.s32 128, 128
          %171 = vsyncadd [#allocation9], %s170
          %s173 = sshll.u32 [#allocation8], 4
          %s174 = int_to_ptr.vmem [resolvable:$true] %s173
          %176 = dma.hbm_to_vmem [thread:$0]  %s3, 128, %s174, [#allocation9]
        $region20: #{tpu_custom_call.1} parent=11 // pred_fallthru
          _
      $region12: #{tpu_custom_call.1} parent=5 // pred_fallthru
        _
      %p177 = scmp.lt.s32.totalorder %s20, 2
      // Predicated region
      $region21: #{tpu_custom_call.1} parent=5 // pred_check
        %p178 = pneg %p177
      $region22: #{tpu_custom_call.1} parent=5 // pred_check_branch
        %180 = sbr.rel (%p178) target = $region24
      $region23: #{tpu_custom_call.1} parent=5 // pred_region
        // Predicated region
        $region25: #{tpu_custom_call.1} parent=23 // pred_check
          %p181 = pneg %p40
        $region26: #{tpu_custom_call.1} parent=23 // pred_check_branch
          %183 = sbr.rel (%p181) target = $region28
        $region27: #{tpu_custom_call.1} parent=23 // pred_region
          %s184 = sand.u32 %s30, 1
          %s185 = scalar_lea.sflag [#allocation3], %s184
          %s186 = sand.u32 %s30, 1
          %s187 = smul.addr %s186, 128
          %s188 = scalar_lea.vmem [#allocation2], %s187
          %s190 = ssub.s32 2048, 2048
          %191 = vsyncadd %s185, %s190
          %s192 = smul.addr %s20, 64
          %s193 = scalar_lea.hbm %s0, %s192
          %s194 = sshll.u32 %s188, 4
          %s195 = int_to_ptr.vmem [resolvable:$true] %s194
          %200 = dma.hbm_to_vmem [thread:$0]  %s193, 2048, %s195, %s185, 128, 64, 4
        $region28: #{tpu_custom_call.1} parent=23 // pred_fallthru
          _
        // Predicated region
        $region29: #{tpu_custom_call.1} parent=23 // pred_check
          %p201 = pneg %p66
        $region30: #{tpu_custom_call.1} parent=23 // pred_check_branch
          %203 = sbr.rel (%p201) target = $region32
        $region31: #{tpu_custom_call.1} parent=23 // pred_region
          %s204 = sand.u32 %s20, 1
          %s205 = scalar_lea.sflag [#allocation6], %s204
          %s206 = sand.u32 %s56, 1
          %s207 = smul.addr %s206, 8
          %s208 = scalar_lea.vmem [#allocation5], %s207
          %s210 = ssub.s32 128, 128
          %211 = vsyncadd %s205, %s210
          %s212 = smul.addr %s20, 128
          %s213 = scalar_lea.hbm %s1, %s212
          %s215 = sshll.u32 %s208, 4
          %s216 = int_to_ptr.vmem [resolvable:$true] %s215
          %218 = dma.hbm_to_vmem [thread:$0]  %s213, 128, %s216, %s205
        $region32: #{tpu_custom_call.1} parent=23 // pred_fallthru
          _
      $region24: #{tpu_custom_call.1} parent=5 // pred_fallthru
        _
      %p219 = scmp.le.s32.totalorder 1, %s20
      %p220 = scmp.lt.s32.totalorder %s20, 3
      %p221 = pnand %p219, %p220
      %p222 = pneg %p221
      // Predicated region
      $region33: #{tpu_custom_call.1} parent=5 // pred_check
        _
      $region34: #{tpu_custom_call.1} parent=5 // pred_check_branch
        %224 = sbr.rel (%p221) target = $region36
      $region35: #{tpu_custom_call.1} parent=5 // pred_region
        %s225 = ssub.s32 %s20, 1
        %s226 = sand.u32 %s33, 1
        %s227 = scalar_lea.sflag [#allocation3], %s226
        %s228 = sand.u32 %s33, 1
        %s229 = smul.addr %s228, 128
        %s230 = scalar_lea.vmem [#allocation2], %s229
        // Predicated region
        $region37: #{tpu_custom_call.1} parent=35 // pred_check
          %p231 = pneg %p46
        $region38: #{tpu_custom_call.1} parent=35 // pred_check_branch
          %233 = sbr.rel (%p231) target = $region40
        $region39: #{tpu_custom_call.1} parent=35 // pred_region
          %234 = dma.done %s227, 2048
        $region40: #{tpu_custom_call.1} parent=35 // pred_fallthru
          _
        %s235 = sand.u32 %s25, 1
        %s236 = scalar_lea.sflag [#allocation6], %s235
        %s237 = sand.u32 %s59, 1
        %s238 = smul.addr %s237, 8
        %s239 = scalar_lea.vmem [#allocation5], %s238
        // Predicated region
        $region41: #{tpu_custom_call.1} parent=35 // pred_check
          %p240 = pneg %p72
        $region42: #{tpu_custom_call.1} parent=35 // pred_check_branch
          %242 = sbr.rel (%p240) target = $region44
        $region43: #{tpu_custom_call.1} parent=35 // pred_region
          %243 = dma.done %s236, 128
        $region44: #{tpu_custom_call.1} parent=35 // pred_fallthru
          _
        // Predicated region
        $region45: #{tpu_custom_call.1} parent=35 // pred_check
          %p244 = pneg %p93
        $region46: #{tpu_custom_call.1} parent=35 // pred_check_branch
          %246 = sbr.rel (%p244) target = $region48
        $region47: #{tpu_custom_call.1} parent=35 // pred_region
          %247 = dma.done [#allocation6], 64
        $region48: #{tpu_custom_call.1} parent=35 // pred_fallthru
          _
        // Predicated region
        $region49: #{tpu_custom_call.1} parent=35 // pred_check
          %p248 = pneg %p114
        $region50: #{tpu_custom_call.1} parent=35 // pred_check_branch
          %250 = sbr.rel (%p248) target = $region52
        $region51: #{tpu_custom_call.1} parent=35 // pred_region
          %251 = dma.done [#allocation9], 128
        $region52: #{tpu_custom_call.1} parent=35 // pred_fallthru
          _
        %s252 = sand.u32 %s33, 1
        %s253 = scalar_lea.sflag [#allocation3], %s252
        %s254 = sand.u32 %s33, 1
        %s255 = smul.addr %s254, 128
        %s256 = scalar_lea.vmem [#allocation2], %s255
        %p257 = pneg %p46
        %p258 = pneg %p43
        %s259 = sand.u32 %s25, 1
        %s260 = scalar_lea.sflag [#allocation6], %s259
        %s261 = sand.u32 %s59, 1
        %s262 = smul.addr %s261, 8
        %s263 = scalar_lea.vmem [#allocation5], %s262
        %p264 = pneg %p72
        %p265 = pneg %p69
        %p266 = pneg %p93
        %p267 = pneg %p90
        %p268 = pneg %p114
        %p269 = pneg %p111
        %p270 = pneg %p140
        %p271 = pneg %p137
        %s272 = sand.u32 %s127, 1
        %s273 = scalar_lea.sflag [#allocation4], %s272
        %s274 = sand.u32 %s127, 1
        %s275 = scalar_lea.vmem [#allocation10], %s274
        %v277 = vld [vmem:[#allocation7] sm:$0xf]
        %v278 = vld [vmem:[#allocation8] sm:$0xff]
        %v279 = vlaneseq
        %v280 = vshrl.u32 %v279, 7
        %v281 = vsub.s32 0, %v280
        %v282 = vrot.slane %v278, %v281
        %284 = vbcast.lane.b32.xlu0 %v282, 256
        %v285 = vpop.permute.xlu0 %284
        %v286 = vlaneseq
        %v287 = vshrl.u32 %v286, 7
        %v288 = vsub.s32 1, %v287
        %v289 = vrot.slane %v278, %v288
        %291 = vbcast.lane.b32.xlu0 %v289, 256
        %v292 = vpop.permute.xlu0 %291
        %v293 = vlaneseq
        %v294 = vshrl.u32 %v293, 7
        %v295 = vsub.s32 2, %v294
        %v296 = vrot.slane %v278, %v295
        %298 = vbcast.lane.b32.xlu0 %v296, 256
        %v299 = vpop.permute.xlu0 %298
        %v300 = vlaneseq
        %v301 = vshrl.u32 %v300, 7
        %v302 = vsub.s32 3, %v301
        %v303 = vrot.slane %v278, %v302
        %305 = vbcast.lane.b32.xlu0 %v303, 256
        %v306 = vpop.permute.xlu0 %305
        %v307 = vlaneseq
        %v308 = vshrl.u32 %v307, 7
        %v309 = vsub.s32 4, %v308
        %v310 = vrot.slane %v278, %v309
        %312 = vbcast.lane.b32.xlu0 %v310, 256
        %v313 = vpop.permute.xlu0 %312
        %v314 = vlaneseq
        %v315 = vshrl.u32 %v314, 7
        %v316 = vsub.s32 5, %v315
        %v317 = vrot.slane %v278, %v316
        %319 = vbcast.lane.b32.xlu0 %v317, 256
        %v320 = vpop.permute.xlu0 %319
        %v321 = vlaneseq
        %v322 = vshrl.u32 %v321, 7
        %v323 = vsub.s32 6, %v322
        %v324 = vrot.slane %v278, %v323
        %326 = vbcast.lane.b32.xlu0 %v324, 256
        %v327 = vpop.permute.xlu0 %326
        %v328 = vlaneseq
        %v329 = vshrl.u32 %v328, 7
        %v330 = vsub.s32 7, %v329
        %v331 = vrot.slane %v278, %v330
        %333 = vbcast.lane.b32.xlu0 %v331, 256
        %v334 = vpop.permute.xlu0 %333
        %v335 = vlaneseq
        %v336 = vshrl.u32 %v335, 7
        %v337 = vld [vmem:[%s230] sm:$0xf]
        %v338 = vld [vmem:[%s230 + $0x4] sm:$0xf]
        %v339 = vld [vmem:[%s230 + $0x8] sm:$0xf]
        %v340 = vld [vmem:[%s230 + $0xc] sm:$0xf]
        %v345 = vunpack.c.l.b16 %v337
        %v346 = vunpack.c.l.b16 %v338
        %v347 = vunpack.c.l.b16 %v339
        %v348 = vunpack.c.l.b16 %v340
        %v349 = vpack.c.b16 %v346, %v345
        %v350 = vpack.c.b16 %v348, %v347
        %vm353 = vcmask 261120
        %v355 = vsel %vm353, %v277, 0
        %357 = vmatprep.subr.bf16.mxu0 0
        %358 = vmatpush1.bf16.msra.mxu0 0
        %359 = vmatprep.subr.bf16.mxu0 0
        %360 = vmatpush1.bf16.msra.mxu0 0
        %361 = vmatprep.subr.bf16.mxu0 0
        %362 = vmatpush1.bf16.msra.mxu0 0
        %363 = vmatprep.subr.bf16.mxu0 0
        %364 = vmatpush1.bf16.msra.mxu0 0
        %365 = vmatprep.subr.bf16.mxu0 0
        %366 = vmatpush1.bf16.msra.mxu0 0
        %367 = vmatprep.subr.bf16.mxu0 0
        %368 = vmatpush1.bf16.msra.mxu0 0
        %369 = vmatprep.subr.bf16.mxu0 0
        %370 = vmatpush1.bf16.msra.mxu0 %v350
        %371 = vmatprep.subr.bf16.mxu0 0
        %372 = vmatpush1.bf16.msra.mxu0 %v349
        %373 = vmatprep.subr.bf16.mxu0 0
        %374 = vmatpush2.bf16.msra.mxu0 0
        %375 = vmatprep.subr.bf16.mxu0 0
        %376 = vmatpush2.bf16.msra.mxu0 0
        %377 = vmatprep.subr.bf16.mxu0 0
        %378 = vmatpush2.bf16.msra.mxu0 0
        %379 = vmatprep.subr.bf16.mxu0 0
        %380 = vmatpush2.bf16.msra.mxu0 0
        %381 = vmatprep.subr.bf16.mxu0 0
        %382 = vmatpush2.bf16.msra.mxu0 0
        %383 = vmatprep.subr.bf16.mxu0 0
        %384 = vmatpush2.bf16.msra.mxu0 0
        %385 = vmatprep.subr.bf16.mxu0 0
        %386 = vmatpush2.bf16.msra.mxu0 0
        %387 = vmatprep.subr.bf16.mxu0 0
        %388 = vmatpush2.bf16.msra.mxu0 0
        %389 = vmatprep.mubr.bf16.mxu0 0
        %390 = vmatmul.mubr.bf16.gmra.mxu0 %v355
        %v391 = vpop.f32.mrf.mxu0
        %v392 = vadd.f32 0.0, %v391
        %v393 = vpop.f32.mrf.mxu0
        %v394 = vpop.f32.mrf.mxu0
        %v395 = vpop.f32.mrf.mxu0
        %396 = vdwg.mxu0
        %v397 = vld [vmem:[%s239] sm:$0x1]
        %v398 = vlaneseq
        %v399 = vshrl.u32 %v398, 7
        %v400 = vsub.s32 0, %v399
        %v401 = vrot.slane %v397, %v400
        %vm402 = vcmp.eq.s32.totalorder %v336, %v401
        %v403 = vsel %vm402, 1, 0
        %v404 = vcvt.s32.f32 %v403
        %v405 = vmul.f32 %v392, %v404
        %s406 = scalar_lea.vmem %s230, 16 [#allocation2]
        %v407 = vld [vmem:[%s406] sm:$0xf]
        %v408 = vld [vmem:[%s406 + $0x4] sm:$0xf]
        %v409 = vld [vmem:[%s406 + $0x8] sm:$0xf]
        %v410 = vld [vmem:[%s406 + $0xc] sm:$0xf]
        %v415 = vunpack.c.l.b16 %v407
        %v416 = vunpack.c.l.b16 %v408
        %v417 = vunpack.c.l.b16 %v409
        %v418 = vunpack.c.l.b16 %v410
        %v419 = vpack.c.b16 %v416, %v415
        %v420 = vpack.c.b16 %v418, %v417
        %423 = vmatprep.subr.bf16.mxu0 0
        %424 = vmatpush1.bf16.msra.mxu0 0
        %425 = vmatprep.subr.bf16.mxu0 0
        %426 = vmatpush1.bf16.msra.mxu0 0
        %427 = vmatprep.subr.bf16.mxu0 0
        %428 = vmatpush1.bf16.msra.mxu0 0
        %429 = vmatprep.subr.bf16.mxu0 0
        %430 = vmatpush1.bf16.msra.mxu0 0
        %431 = vmatprep.subr.bf16.mxu0 0
        %432 = vmatpush1.bf16.msra.mxu0 0
        %433 = vmatprep.subr.bf16.mxu0 0
        %434 = vmatpush1.bf16.msra.mxu0 0
        %435 = vmatprep.subr.bf16.mxu0 0
        %436 = vmatpush1.bf16.msra.mxu0 %v420
        %437 = vmatprep.subr.bf16.mxu0 0
        %438 = vmatpush1.bf16.msra.mxu0 %v419
        %439 = vmatprep.subr.bf16.mxu0 0
        %440 = vmatpush2.bf16.msra.mxu0 0
        %441 = vmatprep.subr.bf16.mxu0 0
        %442 = vmatpush2.bf16.msra.mxu0 0
        %443 = vmatprep.subr.bf16.mxu0 0
        %444 = vmatpush2.bf16.msra.mxu0 0
        %445 = vmatprep.subr.bf16.mxu0 0
        %446 = vmatpush2.bf16.msra.mxu0 0
        %447 = vmatprep.subr.bf16.mxu0 0
        %448 = vmatpush2.bf16.msra.mxu0 0
        %449 = vmatprep.subr.bf16.mxu0 0
        %450 = vmatpush2.bf16.msra.mxu0 0
        %451 = vmatprep.subr.bf16.mxu0 0
        %452 = vmatpush2.bf16.msra.mxu0 0
        %453 = vmatprep.subr.bf16.mxu0 0
        %454 = vmatpush2.bf16.msra.mxu0 0
        %455 = vmatprep.mubr.bf16.mxu0 0
        %456 = vmatmul.mubr.bf16.gmra.mxu0 %v355
        %v457 = vpop.f32.mrf.mxu0
        %v458 = vadd.f32 0.0, %v457
        %v459 = vpop.f32.mrf.mxu0
        %v460 = vpop.f32.mrf.mxu0
        %v461 = vpop.f32.mrf.mxu0
        %462 = vdwg.mxu0
        %v463 = vld [vmem:[%s239 + $0x1] sm:$0x1]
        %v464 = vlaneseq
        %v465 = vshrl.u32 %v464, 7
        %v466 = vsub.s32 0, %v465
        %v467 = vrot.slane %v463, %v466
        %vm468 = vcmp.eq.s32.totalorder %v336, %v467
        %v469 = vsel %vm468, 1, 0
        %v470 = vcvt.s32.f32 %v469
        %v471 = vmul.f32 %v285, %v404
        %v472 = vmul.f32 %v292, %v404
        %v473 = vmul.f32 %v299, %v404
        %v474 = vmul.f32 %v306, %v404
        %v475 = vmul.f32 %v313, %v404
        %v476 = vmul.f32 %v320, %v404
        %v477 = vmul.f32 %v327, %v404
        %v478 = vmul.f32 %v334, %v404
        %v479 = vrot.slane %v471, 4
        %v480 = vadd.f32 %v471, %v479
        %v481 = vrot.slane %v480, 2
        %v482 = vadd.f32 %v480, %v481
        %v483 = vrot.slane %v482, 1
        %v484 = vadd.f32 %v482, %v483
        %v485 = vrot.slane %v472, 4
        %v486 = vadd.f32 %v472, %v485
        %v487 = vrot.slane %v486, 2
        %v488 = vadd.f32 %v486, %v487
        %v489 = vrot.slane %v488, 1
        %v490 = vadd.f32 %v488, %v489
        %v491 = vrot.slane %v473, 4
        %v492 = vadd.f32 %v473, %v491
        %v493 = vrot.slane %v492, 2
        %v494 = vadd.f32 %v492, %v493
        %v495 = vrot.slane %v494, 1
        %v496 = vadd.f32 %v494, %v495
        %v497 = vrot.slane %v474, 4
        %v498 = vadd.f32 %v474, %v497
        %v499 = vrot.slane %v498, 2
        %v500 = vadd.f32 %v498, %v499
        %v501 = vrot.slane %v500, 1
        %v502 = vadd.f32 %v500, %v501
        %v503 = vrot.slane %v475, 4
        %v504 = vadd.f32 %v475, %v503
        %v505 = vrot.slane %v504, 2
        %v506 = vadd.f32 %v504, %v505
        %v507 = vrot.slane %v506, 1
        %v508 = vadd.f32 %v506, %v507
        %v509 = vrot.slane %v476, 4
        %v510 = vadd.f32 %v476, %v509
        %v511 = vrot.slane %v510, 2
        %v512 = vadd.f32 %v510, %v511
        %v513 = vrot.slane %v512, 1
        %v514 = vadd.f32 %v512, %v513
        %v515 = vrot.slane %v477, 4
        %v516 = vadd.f32 %v477, %v515
        %v517 = vrot.slane %v516, 2
        %v518 = vadd.f32 %v516, %v517
        %v519 = vrot.slane %v518, 1
        %v520 = vadd.f32 %v518, %v519
        %v521 = vrot.slane %v478, 4
        %v522 = vadd.f32 %v478, %v521
        %v523 = vrot.slane %v522, 2
        %v524 = vadd.f32 %v522, %v523
        %v525 = vrot.slane %v524, 1
        %v526 = vadd.f32 %v524, %v525
        %vm535 = vcmask 1041409
        %v536 = vsel %vm535, %v490, %v484
        %vm537 = vcmask 1042434
        %v538 = vsel %vm537, %v496, %v536
        %vm539 = vcmask 1043459
        %v540 = vsel %vm539, %v502, %v538
        %vm541 = vcmask 1044484
        %v542 = vsel %vm541, %v508, %v540
        %vm543 = vcmask 1045509
        %v544 = vsel %vm543, %v514, %v542
        %vm545 = vcmask 1046534
        %v546 = vsel %vm545, %v520, %v544
        %vm547 = vcmask 1047559
        %v548 = vsel %vm547, %v526, %v546
        %v550 = vadd.f32 %v458, %v548
        %v551 = vmul.f32 %v550, %v470
        %v552 = vadd.f32 %v405, %v551
        %v553 = vadd.f32 %v285, %v392
        %v554 = vadd.f32 %v292, %v392
        %v555 = vadd.f32 %v299, %v392
        %v556 = vadd.f32 %v306, %v392
        %v557 = vadd.f32 %v313, %v392
        %v558 = vadd.f32 %v320, %v392
        %v559 = vadd.f32 %v327, %v392
        %v560 = vadd.f32 %v334, %v392
        %v561 = vrot.slane %v553, 4
        %v562 = vmax.f32 %v553, %v561
        %v563 = vrot.slane %v562, 2
        %v564 = vmax.f32 %v562, %v563
        %v565 = vrot.slane %v564, 1
        %v566 = vmax.f32 %v564, %v565
        %v567 = vrot.slane %v554, 4
        %v568 = vmax.f32 %v554, %v567
        %v569 = vrot.slane %v568, 2
        %v570 = vmax.f32 %v568, %v569
        %v571 = vrot.slane %v570, 1
        %v572 = vmax.f32 %v570, %v571
        %v573 = vrot.slane %v555, 4
        %v574 = vmax.f32 %v555, %v573
        %v575 = vrot.slane %v574, 2
        %v576 = vmax.f32 %v574, %v575
        %v577 = vrot.slane %v576, 1
        %v578 = vmax.f32 %v576, %v577
        %v579 = vrot.slane %v556, 4
        %v580 = vmax.f32 %v556, %v579
        %v581 = vrot.slane %v580, 2
        %v582 = vmax.f32 %v580, %v581
        %v583 = vrot.slane %v582, 1
        %v584 = vmax.f32 %v582, %v583
        %v585 = vrot.slane %v557, 4
        %v586 = vmax.f32 %v557, %v585
        %v587 = vrot.slane %v586, 2
        %v588 = vmax.f32 %v586, %v587
        %v589 = vrot.slane %v588, 1
        %v590 = vmax.f32 %v588, %v589
        %v591 = vrot.slane %v558, 4
        %v592 = vmax.f32 %v558, %v591
        %v593 = vrot.slane %v592, 2
        %v594 = vmax.f32 %v592, %v593
        %v595 = vrot.slane %v594, 1
        %v596 = vmax.f32 %v594, %v595
        %v597 = vrot.slane %v559, 4
        %v598 = vmax.f32 %v559, %v597
        %v599 = vrot.slane %v598, 2
        %v600 = vmax.f32 %v598, %v599
        %v601 = vrot.slane %v600, 1
        %v602 = vmax.f32 %v600, %v601
        %v603 = vrot.slane %v560, 4
        %v604 = vmax.f32 %v560, %v603
        %v605 = vrot.slane %v604, 2
        %v606 = vmax.f32 %v604, %v605
        %v607 = vrot.slane %v606, 1
        %v608 = vmax.f32 %v606, %v607
        %v609 = vsub.f32 %v553, %v566
        %v610 = vsub.f32 %v554, %v572
        %v611 = vsub.f32 %v555, %v578
        %v612 = vsub.f32 %v556, %v584
        %v613 = vsub.f32 %v557, %v590
        %v614 = vsub.f32 %v558, %v596
        %v615 = vsub.f32 %v559, %v602
        %v616 = vsub.f32 %v560, %v608
        %v617 = vmul.f32 %v609, 1.442695
        %v618 = vpow.pop %v617
        %v619 = vmul.f32 %v610, 1.442695
        %v620 = vpow.pop %v619
        %v621 = vmul.f32 %v611, 1.442695
        %v622 = vpow.pop %v621
        %v623 = vmul.f32 %v612, 1.442695
        %v624 = vpow.pop %v623
        %v625 = vmul.f32 %v613, 1.442695
        %v626 = vpow.pop %v625
        %v627 = vmul.f32 %v614, 1.442695
        %v628 = vpow.pop %v627
        %v629 = vmul.f32 %v615, 1.442695
        %v630 = vpow.pop %v629
        %v631 = vmul.f32 %v616, 1.442695
        %v632 = vpow.pop %v631
        %v633 = vrot.slane %v618, 4
        %v634 = vadd.f32 %v618, %v633
        %v635 = vrot.slane %v634, 2
        %v636 = vadd.f32 %v634, %v635
        %v637 = vrot.slane %v636, 1
        %v638 = vadd.f32 %v636, %v637
        %v639 = vrot.slane %v620, 4
        %v640 = vadd.f32 %v620, %v639
        %v641 = vrot.slane %v640, 2
        %v642 = vadd.f32 %v640, %v641
        %v643 = vrot.slane %v642, 1
        %v644 = vadd.f32 %v642, %v643
        %v645 = vrot.slane %v622, 4
        %v646 = vadd.f32 %v622, %v645
        %v647 = vrot.slane %v646, 2
        %v648 = vadd.f32 %v646, %v647
        %v649 = vrot.slane %v648, 1
        %v650 = vadd.f32 %v648, %v649
        %v651 = vrot.slane %v624, 4
        %v652 = vadd.f32 %v624, %v651
        %v653 = vrot.slane %v652, 2
        %v654 = vadd.f32 %v652, %v653
        %v655 = vrot.slane %v654, 1
        %v656 = vadd.f32 %v654, %v655
        %v657 = vrot.slane %v626, 4
        %v658 = vadd.f32 %v626, %v657
        %v659 = vrot.slane %v658, 2
        %v660 = vadd.f32 %v658, %v659
        %v661 = vrot.slane %v660, 1
        %v662 = vadd.f32 %v660, %v661
        %v663 = vrot.slane %v628, 4
        %v664 = vadd.f32 %v628, %v663
        %v665 = vrot.slane %v664, 2
        %v666 = vadd.f32 %v664, %v665
        %v667 = vrot.slane %v666, 1
        %v668 = vadd.f32 %v666, %v667
        %v669 = vrot.slane %v630, 4
        %v670 = vadd.f32 %v630, %v669
        %v671 = vrot.slane %v670, 2
        %v672 = vadd.f32 %v670, %v671
        %v673 = vrot.slane %v672, 1
        %v674 = vadd.f32 %v672, %v673
        %v675 = vrot.slane %v632, 4
        %v676 = vadd.f32 %v632, %v675
        %v677 = vrot.slane %v676, 2
        %v678 = vadd.f32 %v676, %v677
        %v679 = vrot.slane %v678, 1
        %v680 = vadd.f32 %v678, %v679
        %v681 = vlog2.pop %v638
        %v682 = vmul.f32 %v681, 0.6931472
        %v683 = vlog2.pop %v644
        %v684 = vmul.f32 %v683, 0.6931472
        %v685 = vlog2.pop %v650
        %v686 = vmul.f32 %v685, 0.6931472
        %v687 = vlog2.pop %v656
        %v688 = vmul.f32 %v687, 0.6931472
        %v689 = vlog2.pop %v662
        %v690 = vmul.f32 %v689, 0.6931472
        %v691 = vlog2.pop %v668
        %v692 = vmul.f32 %v691, 0.6931472
        %v693 = vlog2.pop %v674
        %v694 = vmul.f32 %v693, 0.6931472
        %v695 = vlog2.pop %v680
        %v696 = vmul.f32 %v695, 0.6931472
        %v697 = vadd.f32 %v682, %v566
        %v698 = vadd.f32 %v684, %v572
        %v699 = vadd.f32 %v686, %v578
        %v700 = vadd.f32 %v688, %v584
        %v701 = vadd.f32 %v690, %v590
        %v702 = vadd.f32 %v692, %v596
        %v703 = vadd.f32 %v694, %v602
        %v704 = vadd.f32 %v696, %v608
        %v706 = vrot.slane %v458, 1
        %v707 = vrot.slane %v458, 2
        %v708 = vrot.slane %v458, 3
        %v709 = vrot.slane %v458, 4
        %v710 = vrot.slane %v458, 5
        %v711 = vrot.slane %v458, 6
        %v712 = vrot.slane %v458, 7
        %v721 = vadd.f32 %v697, %v458
        %v722 = vadd.f32 %v698, %v706
        %v723 = vadd.f32 %v699, %v707
        %v724 = vadd.f32 %v700, %v708
        %v725 = vadd.f32 %v701, %v709
        %v726 = vadd.f32 %v702, %v710
        %v727 = vadd.f32 %v703, %v711
        %v728 = vadd.f32 %v704, %v712
        %s729 = scalar_lea.vmem %s230, 32 [#allocation2]
        %v730 = vld [vmem:[%s729] sm:$0xf]
        %v731 = vld [vmem:[%s729 + $0x4] sm:$0xf]
        %v732 = vld [vmem:[%s729 + $0x8] sm:$0xf]
        %v733 = vld [vmem:[%s729 + $0xc] sm:$0xf]
        %v738 = vunpack.c.l.b16 %v730
        %v739 = vunpack.c.l.b16 %v731
        %v740 = vunpack.c.l.b16 %v732
        %v741 = vunpack.c.l.b16 %v733
        %v742 = vpack.c.b16 %v739, %v738
        %v743 = vpack.c.b16 %v741, %v740
        %746 = vmatprep.subr.bf16.mxu0 0
        %747 = vmatpush1.bf16.msra.mxu0 0
        %748 = vmatprep.subr.bf16.mxu0 0
        %749 = vmatpush1.bf16.msra.mxu0 0
        %750 = vmatprep.subr.bf16.mxu0 0
        %751 = vmatpush1.bf16.msra.mxu0 0
        %752 = vmatprep.subr.bf16.mxu0 0
        %753 = vmatpush1.bf16.msra.mxu0 0
        %754 = vmatprep.subr.bf16.mxu0 0
        %755 = vmatpush1.bf16.msra.mxu0 0
        %756 = vmatprep.subr.bf16.mxu0 0
        %757 = vmatpush1.bf16.msra.mxu0 0
        %758 = vmatprep.subr.bf16.mxu0 0
        %759 = vmatpush1.bf16.msra.mxu0 %v743
        %760 = vmatprep.subr.bf16.mxu0 0
        %761 = vmatpush1.bf16.msra.mxu0 %v742
        %762 = vmatprep.subr.bf16.mxu0 0
        %763 = vmatpush2.bf16.msra.mxu0 0
        %764 = vmatprep.subr.bf16.mxu0 0
        %765 = vmatpush2.bf16.msra.mxu0 0
        %766 = vmatprep.subr.bf16.mxu0 0
        %767 = vmatpush2.bf16.msra.mxu0 0
        %768 = vmatprep.subr.bf16.mxu0 0
        %769 = vmatpush2.bf16.msra.mxu0 0
        %770 = vmatprep.subr.bf16.mxu0 0
        %771 = vmatpush2.bf16.msra.mxu0 0
        %772 = vmatprep.subr.bf16.mxu0 0
        %773 = vmatpush2.bf16.msra.mxu0 0
        %774 = vmatprep.subr.bf16.mxu0 0
        %775 = vmatpush2.bf16.msra.mxu0 0
        %776 = vmatprep.subr.bf16.mxu0 0
        %777 = vmatpush2.bf16.msra.mxu0 0
        %778 = vmatprep.mubr.bf16.mxu0 0
        %779 = vmatmul.mubr.bf16.gmra.mxu0 %v355
        %v780 = vpop.f32.mrf.mxu0
        %v781 = vadd.f32 0.0, %v780
        %v782 = vpop.f32.mrf.mxu0
        %v783 = vpop.f32.mrf.mxu0
        %v784 = vpop.f32.mrf.mxu0
        %785 = vdwg.mxu0
        %v786 = vld [vmem:[%s239 + $0x2] sm:$0x1]
        %v787 = vlaneseq
        %v788 = vshrl.u32 %v787, 7
        %v789 = vsub.s32 0, %v788
        %v790 = vrot.slane %v786, %v789
        %vm791 = vcmp.eq.s32.totalorder %v336, %v790
        %v792 = vsel %vm791, 1, 0
        %v793 = vcvt.s32.f32 %v792
        %v794 = vmul.f32 %v285, %v470
        %v795 = vmul.f32 %v292, %v470
        %v796 = vmul.f32 %v299, %v470
        %v797 = vmul.f32 %v306, %v470
        %v798 = vmul.f32 %v313, %v470
        %v799 = vmul.f32 %v320, %v470
        %v800 = vmul.f32 %v327, %v470
        %v801 = vmul.f32 %v334, %v470
        %v802 = vrot.slane %v794, 4
        %v803 = vadd.f32 %v794, %v802
        %v804 = vrot.slane %v803, 2
        %v805 = vadd.f32 %v803, %v804
        %v806 = vrot.slane %v805, 1
        %v807 = vadd.f32 %v805, %v806
        %v808 = vrot.slane %v795, 4
        %v809 = vadd.f32 %v795, %v808
        %v810 = vrot.slane %v809, 2
        %v811 = vadd.f32 %v809, %v810
        %v812 = vrot.slane %v811, 1
        %v813 = vadd.f32 %v811, %v812
        %v814 = vrot.slane %v796, 4
        %v815 = vadd.f32 %v796, %v814
        %v816 = vrot.slane %v815, 2
        %v817 = vadd.f32 %v815, %v816
        %v818 = vrot.slane %v817, 1
        %v819 = vadd.f32 %v817, %v818
        %v820 = vrot.slane %v797, 4
        %v821 = vadd.f32 %v797, %v820
        %v822 = vrot.slane %v821, 2
        %v823 = vadd.f32 %v821, %v822
        %v824 = vrot.slane %v823, 1
        %v825 = vadd.f32 %v823, %v824
        %v826 = vrot.slane %v798, 4
        %v827 = vadd.f32 %v798, %v826
        %v828 = vrot.slane %v827, 2
        %v829 = vadd.f32 %v827, %v828
        %v830 = vrot.slane %v829, 1
        %v831 = vadd.f32 %v829, %v830
        %v832 = vrot.slane %v799, 4
        %v833 = vadd.f32 %v799, %v832
        %v834 = vrot.slane %v833, 2
        %v835 = vadd.f32 %v833, %v834
        %v836 = vrot.slane %v835, 1
        %v837 = vadd.f32 %v835, %v836
        %v838 = vrot.slane %v800, 4
        %v839 = vadd.f32 %v800, %v838
        %v840 = vrot.slane %v839, 2
        %v841 = vadd.f32 %v839, %v840
        %v842 = vrot.slane %v841, 1
        %v843 = vadd.f32 %v841, %v842
        %v844 = vrot.slane %v801, 4
        %v845 = vadd.f32 %v801, %v844
        %v846 = vrot.slane %v845, 2
        %v847 = vadd.f32 %v845, %v846
        %v848 = vrot.slane %v847, 1
        %v849 = vadd.f32 %v847, %v848
        %v858 = vsel %vm535, %v813, %v807
        %v859 = vsel %vm537, %v819, %v858
        %v860 = vsel %vm539, %v825, %v859
        %v861 = vsel %vm541, %v831, %v860
        %v862 = vsel %vm543, %v837, %v861
        %v863 = vsel %vm545, %v843, %v862
        %v864 = vsel %vm547, %v849, %v863
        %v866 = vadd.f32 %v781, %v864
        %v867 = vmul.f32 %v866, %v793
        %v868 = vadd.f32 %v552, %v867
        %v877 = vrot.slane %v722, 7
        %v878 = vsel %vm535, %v877, %v721
        %v879 = vrot.slane %v723, 6
        %v880 = vsel %vm537, %v879, %v878
        %v881 = vrot.slane %v724, 5
        %v882 = vsel %vm539, %v881, %v880
        %v883 = vrot.slane %v725, 4
        %v884 = vsel %vm541, %v883, %v882
        %v885 = vrot.slane %v726, 3
        %v886 = vsel %vm543, %v885, %v884
        %v887 = vrot.slane %v727, 2
        %v888 = vsel %vm545, %v887, %v886
        %v889 = vrot.slane %v728, 1
        %v890 = vsel %vm547, %v889, %v888
        %v892 = vadd.f32 %v285, %v890
        %v893 = vadd.f32 %v292, %v890
        %v894 = vadd.f32 %v299, %v890
        %v895 = vadd.f32 %v306, %v890
        %v896 = vadd.f32 %v313, %v890
        %v897 = vadd.f32 %v320, %v890
        %v898 = vadd.f32 %v327, %v890
        %v899 = vadd.f32 %v334, %v890
        %v900 = vrot.slane %v892, 4
        %v901 = vmax.f32 %v892, %v900
        %v902 = vrot.slane %v901, 2
        %v903 = vmax.f32 %v901, %v902
        %v904 = vrot.slane %v903, 1
        %v905 = vmax.f32 %v903, %v904
        %v906 = vrot.slane %v893, 4
        %v907 = vmax.f32 %v893, %v906
        %v908 = vrot.slane %v907, 2
        %v909 = vmax.f32 %v907, %v908
        %v910 = vrot.slane %v909, 1
        %v911 = vmax.f32 %v909, %v910
        %v912 = vrot.slane %v894, 4
        %v913 = vmax.f32 %v894, %v912
        %v914 = vrot.slane %v913, 2
        %v915 = vmax.f32 %v913, %v914
        %v916 = vrot.slane %v915, 1
        %v917 = vmax.f32 %v915, %v916
        %v918 = vrot.slane %v895, 4
        %v919 = vmax.f32 %v895, %v918
        %v920 = vrot.slane %v919, 2
        %v921 = vmax.f32 %v919, %v920
        %v922 = vrot.slane %v921, 1
        %v923 = vmax.f32 %v921, %v922
        %v924 = vrot.slane %v896, 4
        %v925 = vmax.f32 %v896, %v924
        %v926 = vrot.slane %v925, 2
        %v927 = vmax.f32 %v925, %v926
        %v928 = vrot.slane %v927, 1
        %v929 = vmax.f32 %v927, %v928
        %v930 = vrot.slane %v897, 4
        %v931 = vmax.f32 %v897, %v930
        %v932 = vrot.slane %v931, 2
        %v933 = vmax.f32 %v931, %v932
        %v934 = vrot.slane %v933, 1
        %v935 = vmax.f32 %v933, %v934
        %v936 = vrot.slane %v898, 4
        %v937 = vmax.f32 %v898, %v936
        %v938 = vrot.slane %v937, 2
        %v939 = vmax.f32 %v937, %v938
        %v940 = vrot.slane %v939, 1
        %v941 = vmax.f32 %v939, %v940
        %v942 = vrot.slane %v899, 4
        %v943 = vmax.f32 %v899, %v942
        %v944 = vrot.slane %v943, 2
        %v945 = vmax.f32 %v943, %v944
        %v946 = vrot.slane %v945, 1
        %v947 = vmax.f32 %v945, %v946
        %v948 = vsub.f32 %v892, %v905
        %v949 = vsub.f32 %v893, %v911
        %v950 = vsub.f32 %v894, %v917
        %v951 = vsub.f32 %v895, %v923
        %v952 = vsub.f32 %v896, %v929
        %v953 = vsub.f32 %v897, %v935
        %v954 = vsub.f32 %v898, %v941
        %v955 = vsub.f32 %v899, %v947
        %v956 = vmul.f32 %v948, 1.442695
        %v957 = vpow.pop %v956
        %v958 = vmul.f32 %v949, 1.442695
        %v959 = vpow.pop %v958
        %v960 = vmul.f32 %v950, 1.442695
        %v961 = vpow.pop %v960
        %v962 = vmul.f32 %v951, 1.442695
        %v963 = vpow.pop %v962
        %v964 = vmul.f32 %v952, 1.442695
        %v965 = vpow.pop %v964
        %v966 = vmul.f32 %v953, 1.442695
        %v967 = vpow.pop %v966
        %v968 = vmul.f32 %v954, 1.442695
        %v969 = vpow.pop %v968
        %v970 = vmul.f32 %v955, 1.442695
        %v971 = vpow.pop %v970
        %v972 = vrot.slane %v957, 4
        %v973 = vadd.f32 %v957, %v972
        %v974 = vrot.slane %v973, 2
        %v975 = vadd.f32 %v973, %v974
        %v976 = vrot.slane %v975, 1
        %v977 = vadd.f32 %v975, %v976
        %v978 = vrot.slane %v959, 4
        %v979 = vadd.f32 %v959, %v978
        %v980 = vrot.slane %v979, 2
        %v981 = vadd.f32 %v979, %v980
        %v982 = vrot.slane %v981, 1
        %v983 = vadd.f32 %v981, %v982
        %v984 = vrot.slane %v961, 4
        %v985 = vadd.f32 %v961, %v984
        %v986 = vrot.slane %v985, 2
        %v987 = vadd.f32 %v985, %v986
        %v988 = vrot.slane %v987, 1
        %v989 = vadd.f32 %v987, %v988
        %v990 = vrot.slane %v963, 4
        %v991 = vadd.f32 %v963, %v990
        %v992 = vrot.slane %v991, 2
        %v993 = vadd.f32 %v991, %v992
        %v994 = vrot.slane %v993, 1
        %v995 = vadd.f32 %v993, %v994
        %v996 = vrot.slane %v965, 4
        %v997 = vadd.f32 %v965, %v996
        %v998 = vrot.slane %v997, 2
        %v999 = vadd.f32 %v997, %v998
        %v1000 = vrot.slane %v999, 1
        %v1001 = vadd.f32 %v999, %v1000
        %v1002 = vrot.slane %v967, 4
        %v1003 = vadd.f32 %v967, %v1002
        %v1004 = vrot.slane %v1003, 2
        %v1005 = vadd.f32 %v1003, %v1004
        %v1006 = vrot.slane %v1005, 1
        %v1007 = vadd.f32 %v1005, %v1006
        %v1008 = vrot.slane %v969, 4
        %v1009 = vadd.f32 %v969, %v1008
        %v1010 = vrot.slane %v1009, 2
        %v1011 = vadd.f32 %v1009, %v1010
        %v1012 = vrot.slane %v1011, 1
        %v1013 = vadd.f32 %v1011, %v1012
        %v1014 = vrot.slane %v971, 4
        %v1015 = vadd.f32 %v971, %v1014
        %v1016 = vrot.slane %v1015, 2
        %v1017 = vadd.f32 %v1015, %v1016
        %v1018 = vrot.slane %v1017, 1
        %v1019 = vadd.f32 %v1017, %v1018
        %v1020 = vlog2.pop %v977
        %v1021 = vmul.f32 %v1020, 0.6931472
        %v1022 = vlog2.pop %v983
        %v1023 = vmul.f32 %v1022, 0.6931472
        %v1024 = vlog2.pop %v989
        %v1025 = vmul.f32 %v1024, 0.6931472
        %v1026 = vlog2.pop %v995
        %v1027 = vmul.f32 %v1026, 0.6931472
        %v1028 = vlog2.pop %v1001
        %v1029 = vmul.f32 %v1028, 0.6931472
        %v1030 = vlog2.pop %v1007
        %v1031 = vmul.f32 %v1030, 0.6931472
        %v1032 = vlog2.pop %v1013
        %v1033 = vmul.f32 %v1032, 0.6931472
        %v1034 = vlog2.pop %v1019
        %v1035 = vmul.f32 %v1034, 0.6931472
        %v1036 = vadd.f32 %v1021, %v905
        %v1037 = vadd.f32 %v1023, %v911
        %v1038 = vadd.f32 %v1025, %v917
        %v1039 = vadd.f32 %v1027, %v923
        %v1040 = vadd.f32 %v1029, %v929
        %v1041 = vadd.f32 %v1031, %v935
        %v1042 = vadd.f32 %v1033, %v941
        %v1043 = vadd.f32 %v1035, %v947
        %v1045 = vrot.slane %v781, 1
        %v1046 = vrot.slane %v781, 2
        %v1047 = vrot.slane %v781, 3
        %v1048 = vrot.slane %v781, 4
        %v1049 = vrot.slane %v781, 5
        %v1050 = vrot.slane %v781, 6
        %v1051 = vrot.slane %v781, 7
        %v1060 = vadd.f32 %v1036, %v781
        %v1061 = vadd.f32 %v1037, %v1045
        %v1062 = vadd.f32 %v1038, %v1046
        %v1063 = vadd.f32 %v1039, %v1047
        %v1064 = vadd.f32 %v1040, %v1048
        %v1065 = vadd.f32 %v1041, %v1049
        %v1066 = vadd.f32 %v1042, %v1050
        %v1067 = vadd.f32 %v1043, %v1051
        %s1068 = scalar_lea.vmem %s230, 48 [#allocation2]
        %v1069 = vld [vmem:[%s1068] sm:$0xf]
        %v1070 = vld [vmem:[%s1068 + $0x4] sm:$0xf]
        %v1071 = vld [vmem:[%s1068 + $0x8] sm:$0xf]
        %v1072 = vld [vmem:[%s1068 + $0xc] sm:$0xf]
        %v1077 = vunpack.c.l.b16 %v1069
        %v1078 = vunpack.c.l.b16 %v1070
        %v1079 = vunpack.c.l.b16 %v1071
        %v1080 = vunpack.c.l.b16 %v1072
        %v1081 = vpack.c.b16 %v1078, %v1077
        %v1082 = vpack.c.b16 %v1080, %v1079
        %1085 = vmatprep.subr.bf16.mxu0 0
        %1086 = vmatpush1.bf16.msra.mxu0 0
        %1087 = vmatprep.subr.bf16.mxu0 0
        %1088 = vmatpush1.bf16.msra.mxu0 0
        %1089 = vmatprep.subr.bf16.mxu0 0
        %1090 = vmatpush1.bf16.msra.mxu0 0
        %1091 = vmatprep.subr.bf16.mxu0 0
        %1092 = vmatpush1.bf16.msra.mxu0 0
        %1093 = vmatprep.subr.bf16.mxu0 0
        %1094 = vmatpush1.bf16.msra.mxu0 0
        %1095 = vmatprep.subr.bf16.mxu0 0
        %1096 = vmatpush1.bf16.msra.mxu0 0
        %1097 = vmatprep.subr.bf16.mxu0 0
        %1098 = vmatpush1.bf16.msra.mxu0 %v1082
        %1099 = vmatprep.subr.bf16.mxu0 0
        %1100 = vmatpush1.bf16.msra.mxu0 %v1081
        %1101 = vmatprep.subr.bf16.mxu0 0
        %1102 = vmatpush2.bf16.msra.mxu0 0
        %1103 = vmatprep.subr.bf16.mxu0 0
        %1104 = vmatpush2.bf16.msra.mxu0 0
        %1105 = vmatprep.subr.bf16.mxu0 0
        %1106 = vmatpush2.bf16.msra.mxu0 0
        %1107 = vmatprep.subr.bf16.mxu0 0
        %1108 = vmatpush2.bf16.msra.mxu0 0
        %1109 = vmatprep.subr.bf16.mxu0 0
        %1110 = vmatpush2.bf16.msra.mxu0 0
        %1111 = vmatprep.subr.bf16.mxu0 0
        %1112 = vmatpush2.bf16.msra.mxu0 0
        %1113 = vmatprep.subr.bf16.mxu0 0
        %1114 = vmatpush2.bf16.msra.mxu0 0
        %1115 = vmatprep.subr.bf16.mxu0 0
        %1116 = vmatpush2.bf16.msra.mxu0 0
        %1117 = vmatprep.mubr.bf16.mxu0 0
        %1118 = vmatmul.mubr.bf16.gmra.mxu0 %v355
        %v1119 = vpop.f32.mrf.mxu0
        %v1120 = vadd.f32 0.0, %v1119
        %v1121 = vpop.f32.mrf.mxu0
        %v1122 = vpop.f32.mrf.mxu0
        %v1123 = vpop.f32.mrf.mxu0
        %1124 = vdwg.mxu0
        %v1125 = vld [vmem:[%s239 + $0x3] sm:$0x1]
        %v1126 = vlaneseq
        %v1127 = vshrl.u32 %v1126, 7
        %v1128 = vsub.s32 0, %v1127
        %v1129 = vrot.slane %v1125, %v1128
        %vm1130 = vcmp.eq.s32.totalorder %v336, %v1129
        %v1131 = vsel %vm1130, 1, 0
        %v1132 = vcvt.s32.f32 %v1131
        %v1133 = vmul.f32 %v285, %v793
        %v1134 = vmul.f32 %v292, %v793
        %v1135 = vmul.f32 %v299, %v793
        %v1136 = vmul.f32 %v306, %v793
        %v1137 = vmul.f32 %v313, %v793
        %v1138 = vmul.f32 %v320, %v793
        %v1139 = vmul.f32 %v327, %v793
        %v1140 = vmul.f32 %v334, %v793
        %v1141 = vrot.slane %v1133, 4
        %v1142 = vadd.f32 %v1133, %v1141
        %v1143 = vrot.slane %v1142, 2
        %v1144 = vadd.f32 %v1142, %v1143
        %v1145 = vrot.slane %v1144, 1
        %v1146 = vadd.f32 %v1144, %v1145
        %v1147 = vrot.slane %v1134, 4
        %v1148 = vadd.f32 %v1134, %v1147
        %v1149 = vrot.slane %v1148, 2
        %v1150 = vadd.f32 %v1148, %v1149
        %v1151 = vrot.slane %v1150, 1
        %v1152 = vadd.f32 %v1150, %v1151
        %v1153 = vrot.slane %v1135, 4
        %v1154 = vadd.f32 %v1135, %v1153
        %v1155 = vrot.slane %v1154, 2
        %v1156 = vadd.f32 %v1154, %v1155
        %v1157 = vrot.slane %v1156, 1
        %v1158 = vadd.f32 %v1156, %v1157
        %v1159 = vrot.slane %v1136, 4
        %v1160 = vadd.f32 %v1136, %v1159
        %v1161 = vrot.slane %v1160, 2
        %v1162 = vadd.f32 %v1160, %v1161
        %v1163 = vrot.slane %v1162, 1
        %v1164 = vadd.f32 %v1162, %v1163
        %v1165 = vrot.slane %v1137, 4
        %v1166 = vadd.f32 %v1137, %v1165
        %v1167 = vrot.slane %v1166, 2
        %v1168 = vadd.f32 %v1166, %v1167
        %v1169 = vrot.slane %v1168, 1
        %v1170 = vadd.f32 %v1168, %v1169
        %v1171 = vrot.slane %v1138, 4
        %v1172 = vadd.f32 %v1138, %v1171
        %v1173 = vrot.slane %v1172, 2
        %v1174 = vadd.f32 %v1172, %v1173
        %v1175 = vrot.slane %v1174, 1
        %v1176 = vadd.f32 %v1174, %v1175
        %v1177 = vrot.slane %v1139, 4
        %v1178 = vadd.f32 %v1139, %v1177
        %v1179 = vrot.slane %v1178, 2
        %v1180 = vadd.f32 %v1178, %v1179
        %v1181 = vrot.slane %v1180, 1
        %v1182 = vadd.f32 %v1180, %v1181
        %v1183 = vrot.slane %v1140, 4
        %v1184 = vadd.f32 %v1140, %v1183
        %v1185 = vrot.slane %v1184, 2
        %v1186 = vadd.f32 %v1184, %v1185
        %v1187 = vrot.slane %v1186, 1
        %v1188 = vadd.f32 %v1186, %v1187
        %v1197 = vsel %vm535, %v1152, %v1146
        %v1198 = vsel %vm537, %v1158, %v1197
        %v1199 = vsel %vm539, %v1164, %v1198
        %v1200 = vsel %vm541, %v1170, %v1199
        %v1201 = vsel %vm543, %v1176, %v1200
        %v1202 = vsel %vm545, %v1182, %v1201
        %v1203 = vsel %vm547, %v1188, %v1202
        %v1205 = vadd.f32 %v1120, %v1203
        %v1206 = vmul.f32 %v1205, %v1132
        %v1207 = vadd.f32 %v868, %v1206
        %v1216 = vrot.slane %v1061, 7
        %v1217 = vsel %vm535, %v1216, %v1060
        %v1218 = vrot.slane %v1062, 6
        %v1219 = vsel %vm537, %v1218, %v1217
        %v1220 = vrot.slane %v1063, 5
        %v1221 = vsel %vm539, %v1220, %v1219
        %v1222 = vrot.slane %v1064, 4
        %v1223 = vsel %vm541, %v1222, %v1221
        %v1224 = vrot.slane %v1065, 3
        %v1225 = vsel %vm543, %v1224, %v1223
        %v1226 = vrot.slane %v1066, 2
        %v1227 = vsel %vm545, %v1226, %v1225
        %v1228 = vrot.slane %v1067, 1
        %v1229 = vsel %vm547, %v1228, %v1227
        %v1231 = vadd.f32 %v285, %v1229
        %v1232 = vadd.f32 %v292, %v1229
        %v1233 = vadd.f32 %v299, %v1229
        %v1234 = vadd.f32 %v306, %v1229
        %v1235 = vadd.f32 %v313, %v1229
        %v1236 = vadd.f32 %v320, %v1229
        %v1237 = vadd.f32 %v327, %v1229
        %v1238 = vadd.f32 %v334, %v1229
        %v1239 = vrot.slane %v1231, 4
        %v1240 = vmax.f32 %v1231, %v1239
        %v1241 = vrot.slane %v1240, 2
        %v1242 = vmax.f32 %v1240, %v1241
        %v1243 = vrot.slane %v1242, 1
        %v1244 = vmax.f32 %v1242, %v1243
        %v1245 = vrot.slane %v1232, 4
        %v1246 = vmax.f32 %v1232, %v1245
        %v1247 = vrot.slane %v1246, 2
        %v1248 = vmax.f32 %v1246, %v1247
        %v1249 = vrot.slane %v1248, 1
        %v1250 = vmax.f32 %v1248, %v1249
        %v1251 = vrot.slane %v1233, 4
        %v1252 = vmax.f32 %v1233, %v1251
        %v1253 = vrot.slane %v1252, 2
        %v1254 = vmax.f32 %v1252, %v1253
        %v1255 = vrot.slane %v1254, 1
        %v1256 = vmax.f32 %v1254, %v1255
        %v1257 = vrot.slane %v1234, 4
        %v1258 = vmax.f32 %v1234, %v1257
        %v1259 = vrot.slane %v1258, 2
        %v1260 = vmax.f32 %v1258, %v1259
        %v1261 = vrot.slane %v1260, 1
        %v1262 = vmax.f32 %v1260, %v1261
        %v1263 = vrot.slane %v1235, 4
        %v1264 = vmax.f32 %v1235, %v1263
        %v1265 = vrot.slane %v1264, 2
        %v1266 = vmax.f32 %v1264, %v1265
        %v1267 = vrot.slane %v1266, 1
        %v1268 = vmax.f32 %v1266, %v1267
        %v1269 = vrot.slane %v1236, 4
        %v1270 = vmax.f32 %v1236, %v1269
        %v1271 = vrot.slane %v1270, 2
        %v1272 = vmax.f32 %v1270, %v1271
        %v1273 = vrot.slane %v1272, 1
        %v1274 = vmax.f32 %v1272, %v1273
        %v1275 = vrot.slane %v1237, 4
        %v1276 = vmax.f32 %v1237, %v1275
        %v1277 = vrot.slane %v1276, 2
        %v1278 = vmax.f32 %v1276, %v1277
        %v1279 = vrot.slane %v1278, 1
        %v1280 = vmax.f32 %v1278, %v1279
        %v1281 = vrot.slane %v1238, 4
        %v1282 = vmax.f32 %v1238, %v1281
        %v1283 = vrot.slane %v1282, 2
        %v1284 = vmax.f32 %v1282, %v1283
        %v1285 = vrot.slane %v1284, 1
        %v1286 = vmax.f32 %v1284, %v1285
        %v1287 = vsub.f32 %v1231, %v1244
        %v1288 = vsub.f32 %v1232, %v1250
        %v1289 = vsub.f32 %v1233, %v1256
        %v1290 = vsub.f32 %v1234, %v1262
        %v1291 = vsub.f32 %v1235, %v1268
        %v1292 = vsub.f32 %v1236, %v1274
        %v1293 = vsub.f32 %v1237, %v1280
        %v1294 = vsub.f32 %v1238, %v1286
        %v1295 = vmul.f32 %v1287, 1.442695
        %v1296 = vpow.pop %v1295
        %v1297 = vmul.f32 %v1288, 1.442695
        %v1298 = vpow.pop %v1297
        %v1299 = vmul.f32 %v1289, 1.442695
        %v1300 = vpow.pop %v1299
        %v1301 = vmul.f32 %v1290, 1.442695
        %v1302 = vpow.pop %v1301
        %v1303 = vmul.f32 %v1291, 1.442695
        %v1304 = vpow.pop %v1303
        %v1305 = vmul.f32 %v1292, 1.442695
        %v1306 = vpow.pop %v1305
        %v1307 = vmul.f32 %v1293, 1.442695
        %v1308 = vpow.pop %v1307
        %v1309 = vmul.f32 %v1294, 1.442695
        %v1310 = vpow.pop %v1309
        %v1311 = vrot.slane %v1296, 4
        %v1312 = vadd.f32 %v1296, %v1311
        %v1313 = vrot.slane %v1312, 2
        %v1314 = vadd.f32 %v1312, %v1313
        %v1315 = vrot.slane %v1314, 1
        %v1316 = vadd.f32 %v1314, %v1315
        %v1317 = vrot.slane %v1298, 4
        %v1318 = vadd.f32 %v1298, %v1317
        %v1319 = vrot.slane %v1318, 2
        %v1320 = vadd.f32 %v1318, %v1319
        %v1321 = vrot.slane %v1320, 1
        %v1322 = vadd.f32 %v1320, %v1321
        %v1323 = vrot.slane %v1300, 4
        %v1324 = vadd.f32 %v1300, %v1323
        %v1325 = vrot.slane %v1324, 2
        %v1326 = vadd.f32 %v1324, %v1325
        %v1327 = vrot.slane %v1326, 1
        %v1328 = vadd.f32 %v1326, %v1327
        %v1329 = vrot.slane %v1302, 4
        %v1330 = vadd.f32 %v1302, %v1329
        %v1331 = vrot.slane %v1330, 2
        %v1332 = vadd.f32 %v1330, %v1331
        %v1333 = vrot.slane %v1332, 1
        %v1334 = vadd.f32 %v1332, %v1333
        %v1335 = vrot.slane %v1304, 4
        %v1336 = vadd.f32 %v1304, %v1335
        %v1337 = vrot.slane %v1336, 2
        %v1338 = vadd.f32 %v1336, %v1337
        %v1339 = vrot.slane %v1338, 1
        %v1340 = vadd.f32 %v1338, %v1339
        %v1341 = vrot.slane %v1306, 4
        %v1342 = vadd.f32 %v1306, %v1341
        %v1343 = vrot.slane %v1342, 2
        %v1344 = vadd.f32 %v1342, %v1343
        %v1345 = vrot.slane %v1344, 1
        %v1346 = vadd.f32 %v1344, %v1345
        %v1347 = vrot.slane %v1308, 4
        %v1348 = vadd.f32 %v1308, %v1347
        %v1349 = vrot.slane %v1348, 2
        %v1350 = vadd.f32 %v1348, %v1349
        %v1351 = vrot.slane %v1350, 1
        %v1352 = vadd.f32 %v1350, %v1351
        %v1353 = vrot.slane %v1310, 4
        %v1354 = vadd.f32 %v1310, %v1353
        %v1355 = vrot.slane %v1354, 2
        %v1356 = vadd.f32 %v1354, %v1355
        %v1357 = vrot.slane %v1356, 1
        %v1358 = vadd.f32 %v1356, %v1357
        %v1359 = vlog2.pop %v1316
        %v1360 = vmul.f32 %v1359, 0.6931472
        %v1361 = vlog2.pop %v1322
        %v1362 = vmul.f32 %v1361, 0.6931472
        %v1363 = vlog2.pop %v1328
        %v1364 = vmul.f32 %v1363, 0.6931472
        %v1365 = vlog2.pop %v1334
        %v1366 = vmul.f32 %v1365, 0.6931472
        %v1367 = vlog2.pop %v1340
        %v1368 = vmul.f32 %v1367, 0.6931472
        %v1369 = vlog2.pop %v1346
        %v1370 = vmul.f32 %v1369, 0.6931472
        %v1371 = vlog2.pop %v1352
        %v1372 = vmul.f32 %v1371, 0.6931472
        %v1373 = vlog2.pop %v1358
        %v1374 = vmul.f32 %v1373, 0.6931472
        %v1375 = vadd.f32 %v1360, %v1244
        %v1376 = vadd.f32 %v1362, %v1250
        %v1377 = vadd.f32 %v1364, %v1256
        %v1378 = vadd.f32 %v1366, %v1262
        %v1379 = vadd.f32 %v1368, %v1268
        %v1380 = vadd.f32 %v1370, %v1274
        %v1381 = vadd.f32 %v1372, %v1280
        %v1382 = vadd.f32 %v1374, %v1286
        %v1384 = vrot.slane %v1120, 1
        %v1385 = vrot.slane %v1120, 2
        %v1386 = vrot.slane %v1120, 3
        %v1387 = vrot.slane %v1120, 4
        %v1388 = vrot.slane %v1120, 5
        %v1389 = vrot.slane %v1120, 6
        %v1390 = vrot.slane %v1120, 7
        %v1399 = vadd.f32 %v1375, %v1120
        %v1400 = vadd.f32 %v1376, %v1384
        %v1401 = vadd.f32 %v1377, %v1385
        %v1402 = vadd.f32 %v1378, %v1386
        %v1403 = vadd.f32 %v1379, %v1387
        %v1404 = vadd.f32 %v1380, %v1388
        %v1405 = vadd.f32 %v1381, %v1389
        %v1406 = vadd.f32 %v1382, %v1390
        %s1407 = scalar_lea.vmem %s230, 64 [#allocation2]
        %v1408 = vld [vmem:[%s1407] sm:$0xf]
        %v1409 = vld [vmem:[%s1407 + $0x4] sm:$0xf]
        %v1410 = vld [vmem:[%s1407 + $0x8] sm:$0xf]
        %v1411 = vld [vmem:[%s1407 + $0xc] sm:$0xf]
        %v1416 = vunpack.c.l.b16 %v1408
        %v1417 = vunpack.c.l.b16 %v1409
        %v1418 = vunpack.c.l.b16 %v1410
        %v1419 = vunpack.c.l.b16 %v1411
        %v1420 = vpack.c.b16 %v1417, %v1416
        %v1421 = vpack.c.b16 %v1419, %v1418
        %1424 = vmatprep.subr.bf16.mxu0 0
        %1425 = vmatpush1.bf16.msra.mxu0 0
        %1426 = vmatprep.subr.bf16.mxu0 0
        %1427 = vmatpush1.bf16.msra.mxu0 0
        %1428 = vmatprep.subr.bf16.mxu0 0
        %1429 = vmatpush1.bf16.msra.mxu0 0
        %1430 = vmatprep.subr.bf16.mxu0 0
        %1431 = vmatpush1.bf16.msra.mxu0 0
        %1432 = vmatprep.subr.bf16.mxu0 0
        %1433 = vmatpush1.bf16.msra.mxu0 0
        %1434 = vmatprep.subr.bf16.mxu0 0
        %1435 = vmatpush1.bf16.msra.mxu0 0
        %1436 = vmatprep.subr.bf16.mxu0 0
        %1437 = vmatpush1.bf16.msra.mxu0 %v1421
        %1438 = vmatprep.subr.bf16.mxu0 0
        %1439 = vmatpush1.bf16.msra.mxu0 %v1420
        %1440 = vmatprep.subr.bf16.mxu0 0
        %1441 = vmatpush2.bf16.msra.mxu0 0
        %1442 = vmatprep.subr.bf16.mxu0 0
        %1443 = vmatpush2.bf16.msra.mxu0 0
        %1444 = vmatprep.subr.bf16.mxu0 0
        %1445 = vmatpush2.bf16.msra.mxu0 0
        %1446 = vmatprep.subr.bf16.mxu0 0
        %1447 = vmatpush2.bf16.msra.mxu0 0
        %1448 = vmatprep.subr.bf16.mxu0 0
        %1449 = vmatpush2.bf16.msra.mxu0 0
        %1450 = vmatprep.subr.bf16.mxu0 0
        %1451 = vmatpush2.bf16.msra.mxu0 0
        %1452 = vmatprep.subr.bf16.mxu0 0
        %1453 = vmatpush2.bf16.msra.mxu0 0
        %1454 = vmatprep.subr.bf16.mxu0 0
        %1455 = vmatpush2.bf16.msra.mxu0 0
        %1456 = vmatprep.mubr.bf16.mxu0 0
        %1457 = vmatmul.mubr.bf16.gmra.mxu0 %v355
        %v1458 = vpop.f32.mrf.mxu0
        %v1459 = vadd.f32 0.0, %v1458
        %v1460 = vpop.f32.mrf.mxu0
        %v1461 = vpop.f32.mrf.mxu0
        %v1462 = vpop.f32.mrf.mxu0
        %1463 = vdwg.mxu0
        %v1464 = vld [vmem:[%s239 + $0x4] sm:$0x1]
        %v1465 = vlaneseq
        %v1466 = vshrl.u32 %v1465, 7
        %v1467 = vsub.s32 0, %v1466
        %v1468 = vrot.slane %v1464, %v1467
        %vm1469 = vcmp.eq.s32.totalorder %v336, %v1468
        %v1470 = vsel %vm1469, 1, 0
        %v1471 = vcvt.s32.f32 %v1470
        %v1472 = vmul.f32 %v285, %v1132
        %v1473 = vmul.f32 %v292, %v1132
        %v1474 = vmul.f32 %v299, %v1132
        %v1475 = vmul.f32 %v306, %v1132
        %v1476 = vmul.f32 %v313, %v1132
        %v1477 = vmul.f32 %v320, %v1132
        %v1478 = vmul.f32 %v327, %v1132
        %v1479 = vmul.f32 %v334, %v1132
        %v1480 = vrot.slane %v1472, 4
        %v1481 = vadd.f32 %v1472, %v1480
        %v1482 = vrot.slane %v1481, 2
        %v1483 = vadd.f32 %v1481, %v1482
        %v1484 = vrot.slane %v1483, 1
        %v1485 = vadd.f32 %v1483, %v1484
        %v1486 = vrot.slane %v1473, 4
        %v1487 = vadd.f32 %v1473, %v1486
        %v1488 = vrot.slane %v1487, 2
        %v1489 = vadd.f32 %v1487, %v1488
        %v1490 = vrot.slane %v1489, 1
        %v1491 = vadd.f32 %v1489, %v1490
        %v1492 = vrot.slane %v1474, 4
        %v1493 = vadd.f32 %v1474, %v1492
        %v1494 = vrot.slane %v1493, 2
        %v1495 = vadd.f32 %v1493, %v1494
        %v1496 = vrot.slane %v1495, 1
        %v1497 = vadd.f32 %v1495, %v1496
        %v1498 = vrot.slane %v1475, 4
        %v1499 = vadd.f32 %v1475, %v1498
        %v1500 = vrot.slane %v1499, 2
        %v1501 = vadd.f32 %v1499, %v1500
        %v1502 = vrot.slane %v1501, 1
        %v1503 = vadd.f32 %v1501, %v1502
        %v1504 = vrot.slane %v1476, 4
        %v1505 = vadd.f32 %v1476, %v1504
        %v1506 = vrot.slane %v1505, 2
        %v1507 = vadd.f32 %v1505, %v1506
        %v1508 = vrot.slane %v1507, 1
        %v1509 = vadd.f32 %v1507, %v1508
        %v1510 = vrot.slane %v1477, 4
        %v1511 = vadd.f32 %v1477, %v1510
        %v1512 = vrot.slane %v1511, 2
        %v1513 = vadd.f32 %v1511, %v1512
        %v1514 = vrot.slane %v1513, 1
        %v1515 = vadd.f32 %v1513, %v1514
        %v1516 = vrot.slane %v1478, 4
        %v1517 = vadd.f32 %v1478, %v1516
        %v1518 = vrot.slane %v1517, 2
        %v1519 = vadd.f32 %v1517, %v1518
        %v1520 = vrot.slane %v1519, 1
        %v1521 = vadd.f32 %v1519, %v1520
        %v1522 = vrot.slane %v1479, 4
        %v1523 = vadd.f32 %v1479, %v1522
        %v1524 = vrot.slane %v1523, 2
        %v1525 = vadd.f32 %v1523, %v1524
        %v1526 = vrot.slane %v1525, 1
        %v1527 = vadd.f32 %v1525, %v1526
        %v1536 = vsel %vm535, %v1491, %v1485
        %v1537 = vsel %vm537, %v1497, %v1536
        %v1538 = vsel %vm539, %v1503, %v1537
        %v1539 = vsel %vm541, %v1509, %v1538
        %v1540 = vsel %vm543, %v1515, %v1539
        %v1541 = vsel %vm545, %v1521, %v1540
        %v1542 = vsel %vm547, %v1527, %v1541
        %v1544 = vadd.f32 %v1459, %v1542
        %v1545 = vmul.f32 %v1544, %v1471
        %v1546 = vadd.f32 %v1207, %v1545
        %v1555 = vrot.slane %v1400, 7
        %v1556 = vsel %vm535, %v1555, %v1399
        %v1557 = vrot.slane %v1401, 6
        %v1558 = vsel %vm537, %v1557, %v1556
        %v1559 = vrot.slane %v1402, 5
        %v1560 = vsel %vm539, %v1559, %v1558
        %v1561 = vrot.slane %v1403, 4
        %v1562 = vsel %vm541, %v1561, %v1560
        %v1563 = vrot.slane %v1404, 3
        %v1564 = vsel %vm543, %v1563, %v1562
        %v1565 = vrot.slane %v1405, 2
        %v1566 = vsel %vm545, %v1565, %v1564
        %v1567 = vrot.slane %v1406, 1
        %v1568 = vsel %vm547, %v1567, %v1566
        %v1570 = vadd.f32 %v285, %v1568
        %v1571 = vadd.f32 %v292, %v1568
        %v1572 = vadd.f32 %v299, %v1568
        %v1573 = vadd.f32 %v306, %v1568
        %v1574 = vadd.f32 %v313, %v1568
        %v1575 = vadd.f32 %v320, %v1568
        %v1576 = vadd.f32 %v327, %v1568
        %v1577 = vadd.f32 %v334, %v1568
        %v1578 = vrot.slane %v1570, 4
        %v1579 = vmax.f32 %v1570, %v1578
        %v1580 = vrot.slane %v1579, 2
        %v1581 = vmax.f32 %v1579, %v1580
        %v1582 = vrot.slane %v1581, 1
        %v1583 = vmax.f32 %v1581, %v1582
        %v1584 = vrot.slane %v1571, 4
        %v1585 = vmax.f32 %v1571, %v1584
        %v1586 = vrot.slane %v1585, 2
        %v1587 = vmax.f32 %v1585, %v1586
        %v1588 = vrot.slane %v1587, 1
        %v1589 = vmax.f32 %v1587, %v1588
        %v1590 = vrot.slane %v1572, 4
        %v1591 = vmax.f32 %v1572, %v1590
        %v1592 = vrot.slane %v1591, 2
        %v1593 = vmax.f32 %v1591, %v1592
        %v1594 = vrot.slane %v1593, 1
        %v1595 = vmax.f32 %v1593, %v1594
        %v1596 = vrot.slane %v1573, 4
        %v1597 = vmax.f32 %v1573, %v1596
        %v1598 = vrot.slane %v1597, 2
        %v1599 = vmax.f32 %v1597, %v1598
        %v1600 = vrot.slane %v1599, 1
        %v1601 = vmax.f32 %v1599, %v1600
        %v1602 = vrot.slane %v1574, 4
        %v1603 = vmax.f32 %v1574, %v1602
        %v1604 = vrot.slane %v1603, 2
        %v1605 = vmax.f32 %v1603, %v1604
        %v1606 = vrot.slane %v1605, 1
        %v1607 = vmax.f32 %v1605, %v1606
        %v1608 = vrot.slane %v1575, 4
        %v1609 = vmax.f32 %v1575, %v1608
        %v1610 = vrot.slane %v1609, 2
        %v1611 = vmax.f32 %v1609, %v1610
        %v1612 = vrot.slane %v1611, 1
        %v1613 = vmax.f32 %v1611, %v1612
        %v1614 = vrot.slane %v1576, 4
        %v1615 = vmax.f32 %v1576, %v1614
        %v1616 = vrot.slane %v1615, 2
        %v1617 = vmax.f32 %v1615, %v1616
        %v1618 = vrot.slane %v1617, 1
        %v1619 = vmax.f32 %v1617, %v1618
        %v1620 = vrot.slane %v1577, 4
        %v1621 = vmax.f32 %v1577, %v1620
        %v1622 = vrot.slane %v1621, 2
        %v1623 = vmax.f32 %v1621, %v1622
        %v1624 = vrot.slane %v1623, 1
        %v1625 = vmax.f32 %v1623, %v1624
        %v1626 = vsub.f32 %v1570, %v1583
        %v1627 = vsub.f32 %v1571, %v1589
        %v1628 = vsub.f32 %v1572, %v1595
        %v1629 = vsub.f32 %v1573, %v1601
        %v1630 = vsub.f32 %v1574, %v1607
        %v1631 = vsub.f32 %v1575, %v1613
        %v1632 = vsub.f32 %v1576, %v1619
        %v1633 = vsub.f32 %v1577, %v1625
        %v1634 = vmul.f32 %v1626, 1.442695
        %v1635 = vpow.pop %v1634
        %v1636 = vmul.f32 %v1627, 1.442695
        %v1637 = vpow.pop %v1636
        %v1638 = vmul.f32 %v1628, 1.442695
        %v1639 = vpow.pop %v1638
        %v1640 = vmul.f32 %v1629, 1.442695
        %v1641 = vpow.pop %v1640
        %v1642 = vmul.f32 %v1630, 1.442695
        %v1643 = vpow.pop %v1642
        %v1644 = vmul.f32 %v1631, 1.442695
        %v1645 = vpow.pop %v1644
        %v1646 = vmul.f32 %v1632, 1.442695
        %v1647 = vpow.pop %v1646
        %v1648 = vmul.f32 %v1633, 1.442695
        %v1649 = vpow.pop %v1648
        %v1650 = vrot.slane %v1635, 4
        %v1651 = vadd.f32 %v1635, %v1650
        %v1652 = vrot.slane %v1651, 2
        %v1653 = vadd.f32 %v1651, %v1652
        %v1654 = vrot.slane %v1653, 1
        %v1655 = vadd.f32 %v1653, %v1654
        %v1656 = vrot.slane %v1637, 4
        %v1657 = vadd.f32 %v1637, %v1656
        %v1658 = vrot.slane %v1657, 2
        %v1659 = vadd.f32 %v1657, %v1658
        %v1660 = vrot.slane %v1659, 1
        %v1661 = vadd.f32 %v1659, %v1660
        %v1662 = vrot.slane %v1639, 4
        %v1663 = vadd.f32 %v1639, %v1662
        %v1664 = vrot.slane %v1663, 2
        %v1665 = vadd.f32 %v1663, %v1664
        %v1666 = vrot.slane %v1665, 1
        %v1667 = vadd.f32 %v1665, %v1666
        %v1668 = vrot.slane %v1641, 4
        %v1669 = vadd.f32 %v1641, %v1668
        %v1670 = vrot.slane %v1669, 2
        %v1671 = vadd.f32 %v1669, %v1670
        %v1672 = vrot.slane %v1671, 1
        %v1673 = vadd.f32 %v1671, %v1672
        %v1674 = vrot.slane %v1643, 4
        %v1675 = vadd.f32 %v1643, %v1674
        %v1676 = vrot.slane %v1675, 2
        %v1677 = vadd.f32 %v1675, %v1676
        %v1678 = vrot.slane %v1677, 1
        %v1679 = vadd.f32 %v1677, %v1678
        %v1680 = vrot.slane %v1645, 4
        %v1681 = vadd.f32 %v1645, %v1680
        %v1682 = vrot.slane %v1681, 2
        %v1683 = vadd.f32 %v1681, %v1682
        %v1684 = vrot.slane %v1683, 1
        %v1685 = vadd.f32 %v1683, %v1684
        %v1686 = vrot.slane %v1647, 4
        %v1687 = vadd.f32 %v1647, %v1686
        %v1688 = vrot.slane %v1687, 2
        %v1689 = vadd.f32 %v1687, %v1688
        %v1690 = vrot.slane %v1689, 1
        %v1691 = vadd.f32 %v1689, %v1690
        %v1692 = vrot.slane %v1649, 4
        %v1693 = vadd.f32 %v1649, %v1692
        %v1694 = vrot.slane %v1693, 2
        %v1695 = vadd.f32 %v1693, %v1694
        %v1696 = vrot.slane %v1695, 1
        %v1697 = vadd.f32 %v1695, %v1696
        %v1698 = vlog2.pop %v1655
        %v1699 = vmul.f32 %v1698, 0.6931472
        %v1700 = vlog2.pop %v1661
        %v1701 = vmul.f32 %v1700, 0.6931472
        %v1702 = vlog2.pop %v1667
        %v1703 = vmul.f32 %v1702, 0.6931472
        %v1704 = vlog2.pop %v1673
        %v1705 = vmul.f32 %v1704, 0.6931472
        %v1706 = vlog2.pop %v1679
        %v1707 = vmul.f32 %v1706, 0.6931472
        %v1708 = vlog2.pop %v1685
        %v1709 = vmul.f32 %v1708, 0.6931472
        %v1710 = vlog2.pop %v1691
        %v1711 = vmul.f32 %v1710, 0.6931472
        %v1712 = vlog2.pop %v1697
        %v1713 = vmul.f32 %v1712, 0.6931472
        %v1714 = vadd.f32 %v1699, %v1583
        %v1715 = vadd.f32 %v1701, %v1589
        %v1716 = vadd.f32 %v1703, %v1595
        %v1717 = vadd.f32 %v1705, %v1601
        %v1718 = vadd.f32 %v1707, %v1607
        %v1719 = vadd.f32 %v1709, %v1613
        %v1720 = vadd.f32 %v1711, %v1619
        %v1721 = vadd.f32 %v1713, %v1625
        %v1723 = vrot.slane %v1459, 1
        %v1724 = vrot.slane %v1459, 2
        %v1725 = vrot.slane %v1459, 3
        %v1726 = vrot.slane %v1459, 4
        %v1727 = vrot.slane %v1459, 5
        %v1728 = vrot.slane %v1459, 6
        %v1729 = vrot.slane %v1459, 7
        %v1738 = vadd.f32 %v1714, %v1459
        %v1739 = vadd.f32 %v1715, %v1723
        %v1740 = vadd.f32 %v1716, %v1724
        %v1741 = vadd.f32 %v1717, %v1725
        %v1742 = vadd.f32 %v1718, %v1726
        %v1743 = vadd.f32 %v1719, %v1727
        %v1744 = vadd.f32 %v1720, %v1728
        %v1745 = vadd.f32 %v1721, %v1729
        %s1746 = scalar_lea.vmem %s230, 80 [#allocation2]
        %v1747 = vld [vmem:[%s1746] sm:$0xf]
        %v1748 = vld [vmem:[%s1746 + $0x4] sm:$0xf]
        %v1749 = vld [vmem:[%s1746 + $0x8] sm:$0xf]
        %v1750 = vld [vmem:[%s1746 + $0xc] sm:$0xf]
        %v1755 = vunpack.c.l.b16 %v1747
        %v1756 = vunpack.c.l.b16 %v1748
        %v1757 = vunpack.c.l.b16 %v1749
        %v1758 = vunpack.c.l.b16 %v1750
        %v1759 = vpack.c.b16 %v1756, %v1755
        %v1760 = vpack.c.b16 %v1758, %v1757
        %1763 = vmatprep.subr.bf16.mxu0 0
        %1764 = vmatpush1.bf16.msra.mxu0 0
        %1765 = vmatprep.subr.bf16.mxu0 0
        %1766 = vmatpush1.bf16.msra.mxu0 0
        %1767 = vmatprep.subr.bf16.mxu0 0
        %1768 = vmatpush1.bf16.msra.mxu0 0
        %1769 = vmatprep.subr.bf16.mxu0 0
        %1770 = vmatpush1.bf16.msra.mxu0 0
        %1771 = vmatprep.subr.bf16.mxu0 0
        %1772 = vmatpush1.bf16.msra.mxu0 0
        %1773 = vmatprep.subr.bf16.mxu0 0
        %1774 = vmatpush1.bf16.msra.mxu0 0
        %1775 = vmatprep.subr.bf16.mxu0 0
        %1776 = vmatpush1.bf16.msra.mxu0 %v1760
        %1777 = vmatprep.subr.bf16.mxu0 0
        %1778 = vmatpush1.bf16.msra.mxu0 %v1759
        %1779 = vmatprep.subr.bf16.mxu0 0
        %1780 = vmatpush2.bf16.msra.mxu0 0
        %1781 = vmatprep.subr.bf16.mxu0 0
        %1782 = vmatpush2.bf16.msra.mxu0 0
        %1783 = vmatprep.subr.bf16.mxu0 0
        %1784 = vmatpush2.bf16.msra.mxu0 0
        %1785 = vmatprep.subr.bf16.mxu0 0
        %1786 = vmatpush2.bf16.msra.mxu0 0
        %1787 = vmatprep.subr.bf16.mxu0 0
        %1788 = vmatpush2.bf16.msra.mxu0 0
        %1789 = vmatprep.subr.bf16.mxu0 0
        %1790 = vmatpush2.bf16.msra.mxu0 0
        %1791 = vmatprep.subr.bf16.mxu0 0
        %1792 = vmatpush2.bf16.msra.mxu0 0
        %1793 = vmatprep.subr.bf16.mxu0 0
        %1794 = vmatpush2.bf16.msra.mxu0 0
        %1795 = vmatprep.mubr.bf16.mxu0 0
        %1796 = vmatmul.mubr.bf16.gmra.mxu0 %v355
        %v1797 = vpop.f32.mrf.mxu0
        %v1798 = vadd.f32 0.0, %v1797
        %v1799 = vpop.f32.mrf.mxu0
        %v1800 = vpop.f32.mrf.mxu0
        %v1801 = vpop.f32.mrf.mxu0
        %1802 = vdwg.mxu0
        %v1803 = vld [vmem:[%s239 + $0x5] sm:$0x1]
        %v1804 = vlaneseq
        %v1805 = vshrl.u32 %v1804, 7
        %v1806 = vsub.s32 0, %v1805
        %v1807 = vrot.slane %v1803, %v1806
        %vm1808 = vcmp.eq.s32.totalorder %v336, %v1807
        %v1809 = vsel %vm1808, 1, 0
        %v1810 = vcvt.s32.f32 %v1809
        %v1811 = vmul.f32 %v285, %v1471
        %v1812 = vmul.f32 %v292, %v1471
        %v1813 = vmul.f32 %v299, %v1471
        %v1814 = vmul.f32 %v306, %v1471
        %v1815 = vmul.f32 %v313, %v1471
        %v1816 = vmul.f32 %v320, %v1471
        %v1817 = vmul.f32 %v327, %v1471
        %v1818 = vmul.f32 %v334, %v1471
        %v1819 = vrot.slane %v1811, 4
        %v1820 = vadd.f32 %v1811, %v1819
        %v1821 = vrot.slane %v1820, 2
        %v1822 = vadd.f32 %v1820, %v1821
        %v1823 = vrot.slane %v1822, 1
        %v1824 = vadd.f32 %v1822, %v1823
        %v1825 = vrot.slane %v1812, 4
        %v1826 = vadd.f32 %v1812, %v1825
        %v1827 = vrot.slane %v1826, 2
        %v1828 = vadd.f32 %v1826, %v1827
        %v1829 = vrot.slane %v1828, 1
        %v1830 = vadd.f32 %v1828, %v1829
        %v1831 = vrot.slane %v1813, 4
        %v1832 = vadd.f32 %v1813, %v1831
        %v1833 = vrot.slane %v1832, 2
        %v1834 = vadd.f32 %v1832, %v1833
        %v1835 = vrot.slane %v1834, 1
        %v1836 = vadd.f32 %v1834, %v1835
        %v1837 = vrot.slane %v1814, 4
        %v1838 = vadd.f32 %v1814, %v1837
        %v1839 = vrot.slane %v1838, 2
        %v1840 = vadd.f32 %v1838, %v1839
        %v1841 = vrot.slane %v1840, 1
        %v1842 = vadd.f32 %v1840, %v1841
        %v1843 = vrot.slane %v1815, 4
        %v1844 = vadd.f32 %v1815, %v1843
        %v1845 = vrot.slane %v1844, 2
        %v1846 = vadd.f32 %v1844, %v1845
        %v1847 = vrot.slane %v1846, 1
        %v1848 = vadd.f32 %v1846, %v1847
        %v1849 = vrot.slane %v1816, 4
        %v1850 = vadd.f32 %v1816, %v1849
        %v1851 = vrot.slane %v1850, 2
        %v1852 = vadd.f32 %v1850, %v1851
        %v1853 = vrot.slane %v1852, 1
        %v1854 = vadd.f32 %v1852, %v1853
        %v1855 = vrot.slane %v1817, 4
        %v1856 = vadd.f32 %v1817, %v1855
        %v1857 = vrot.slane %v1856, 2
        %v1858 = vadd.f32 %v1856, %v1857
        %v1859 = vrot.slane %v1858, 1
        %v1860 = vadd.f32 %v1858, %v1859
        %v1861 = vrot.slane %v1818, 4
        %v1862 = vadd.f32 %v1818, %v1861
        %v1863 = vrot.slane %v1862, 2
        %v1864 = vadd.f32 %v1862, %v1863
        %v1865 = vrot.slane %v1864, 1
        %v1866 = vadd.f32 %v1864, %v1865
        %v1875 = vsel %vm535, %v1830, %v1824
        %v1876 = vsel %vm537, %v1836, %v1875
        %v1877 = vsel %vm539, %v1842, %v1876
        %v1878 = vsel %vm541, %v1848, %v1877
        %v1879 = vsel %vm543, %v1854, %v1878
        %v1880 = vsel %vm545, %v1860, %v1879
        %v1881 = vsel %vm547, %v1866, %v1880
        %v1883 = vadd.f32 %v1798, %v1881
        %v1884 = vmul.f32 %v1883, %v1810
        %v1885 = vadd.f32 %v1546, %v1884
        %v1894 = vrot.slane %v1739, 7
        %v1895 = vsel %vm535, %v1894, %v1738
        %v1896 = vrot.slane %v1740, 6
        %v1897 = vsel %vm537, %v1896, %v1895
        %v1898 = vrot.slane %v1741, 5
        %v1899 = vsel %vm539, %v1898, %v1897
        %v1900 = vrot.slane %v1742, 4
        %v1901 = vsel %vm541, %v1900, %v1899
        %v1902 = vrot.slane %v1743, 3
        %v1903 = vsel %vm543, %v1902, %v1901
        %v1904 = vrot.slane %v1744, 2
        %v1905 = vsel %vm545, %v1904, %v1903
        %v1906 = vrot.slane %v1745, 1
        %v1907 = vsel %vm547, %v1906, %v1905
        %v1909 = vadd.f32 %v285, %v1907
        %v1910 = vadd.f32 %v292, %v1907
        %v1911 = vadd.f32 %v299, %v1907
        %v1912 = vadd.f32 %v306, %v1907
        %v1913 = vadd.f32 %v313, %v1907
        %v1914 = vadd.f32 %v320, %v1907
        %v1915 = vadd.f32 %v327, %v1907
        %v1916 = vadd.f32 %v334, %v1907
        %v1917 = vrot.slane %v1909, 4
        %v1918 = vmax.f32 %v1909, %v1917
        %v1919 = vrot.slane %v1918, 2
        %v1920 = vmax.f32 %v1918, %v1919
        %v1921 = vrot.slane %v1920, 1
        %v1922 = vmax.f32 %v1920, %v1921
        %v1923 = vrot.slane %v1910, 4
        %v1924 = vmax.f32 %v1910, %v1923
        %v1925 = vrot.slane %v1924, 2
        %v1926 = vmax.f32 %v1924, %v1925
        %v1927 = vrot.slane %v1926, 1
        %v1928 = vmax.f32 %v1926, %v1927
        %v1929 = vrot.slane %v1911, 4
        %v1930 = vmax.f32 %v1911, %v1929
        %v1931 = vrot.slane %v1930, 2
        %v1932 = vmax.f32 %v1930, %v1931
        %v1933 = vrot.slane %v1932, 1
        %v1934 = vmax.f32 %v1932, %v1933
        %v1935 = vrot.slane %v1912, 4
        %v1936 = vmax.f32 %v1912, %v1935
        %v1937 = vrot.slane %v1936, 2
        %v1938 = vmax.f32 %v1936, %v1937
        %v1939 = vrot.slane %v1938, 1
        %v1940 = vmax.f32 %v1938, %v1939
        %v1941 = vrot.slane %v1913, 4
        %v1942 = vmax.f32 %v1913, %v1941
        %v1943 = vrot.slane %v1942, 2
        %v1944 = vmax.f32 %v1942, %v1943
        %v1945 = vrot.slane %v1944, 1
        %v1946 = vmax.f32 %v1944, %v1945
        %v1947 = vrot.slane %v1914, 4
        %v1948 = vmax.f32 %v1914, %v1947
        %v1949 = vrot.slane %v1948, 2
        %v1950 = vmax.f32 %v1948, %v1949
        %v1951 = vrot.slane %v1950, 1
        %v1952 = vmax.f32 %v1950, %v1951
        %v1953 = vrot.slane %v1915, 4
        %v1954 = vmax.f32 %v1915, %v1953
        %v1955 = vrot.slane %v1954, 2
        %v1956 = vmax.f32 %v1954, %v1955
        %v1957 = vrot.slane %v1956, 1
        %v1958 = vmax.f32 %v1956, %v1957
        %v1959 = vrot.slane %v1916, 4
        %v1960 = vmax.f32 %v1916, %v1959
        %v1961 = vrot.slane %v1960, 2
        %v1962 = vmax.f32 %v1960, %v1961
        %v1963 = vrot.slane %v1962, 1
        %v1964 = vmax.f32 %v1962, %v1963
        %v1965 = vsub.f32 %v1909, %v1922
        %v1966 = vsub.f32 %v1910, %v1928
        %v1967 = vsub.f32 %v1911, %v1934
        %v1968 = vsub.f32 %v1912, %v1940
        %v1969 = vsub.f32 %v1913, %v1946
        %v1970 = vsub.f32 %v1914, %v1952
        %v1971 = vsub.f32 %v1915, %v1958
        %v1972 = vsub.f32 %v1916, %v1964
        %v1973 = vmul.f32 %v1965, 1.442695
        %v1974 = vpow.pop %v1973
        %v1975 = vmul.f32 %v1966, 1.442695
        %v1976 = vpow.pop %v1975
        %v1977 = vmul.f32 %v1967, 1.442695
        %v1978 = vpow.pop %v1977
        %v1979 = vmul.f32 %v1968, 1.442695
        %v1980 = vpow.pop %v1979
        %v1981 = vmul.f32 %v1969, 1.442695
        %v1982 = vpow.pop %v1981
        %v1983 = vmul.f32 %v1970, 1.442695
        %v1984 = vpow.pop %v1983
        %v1985 = vmul.f32 %v1971, 1.442695
        %v1986 = vpow.pop %v1985
        %v1987 = vmul.f32 %v1972, 1.442695
        %v1988 = vpow.pop %v1987
        %v1989 = vrot.slane %v1974, 4
        %v1990 = vadd.f32 %v1974, %v1989
        %v1991 = vrot.slane %v1990, 2
        %v1992 = vadd.f32 %v1990, %v1991
        %v1993 = vrot.slane %v1992, 1
        %v1994 = vadd.f32 %v1992, %v1993
        %v1995 = vrot.slane %v1976, 4
        %v1996 = vadd.f32 %v1976, %v1995
        %v1997 = vrot.slane %v1996, 2
        %v1998 = vadd.f32 %v1996, %v1997
        %v1999 = vrot.slane %v1998, 1
        %v2000 = vadd.f32 %v1998, %v1999
        %v2001 = vrot.slane %v1978, 4
        %v2002 = vadd.f32 %v1978, %v2001
        %v2003 = vrot.slane %v2002, 2
        %v2004 = vadd.f32 %v2002, %v2003
        %v2005 = vrot.slane %v2004, 1
        %v2006 = vadd.f32 %v2004, %v2005
        %v2007 = vrot.slane %v1980, 4
        %v2008 = vadd.f32 %v1980, %v2007
        %v2009 = vrot.slane %v2008, 2
        %v2010 = vadd.f32 %v2008, %v2009
        %v2011 = vrot.slane %v2010, 1
        %v2012 = vadd.f32 %v2010, %v2011
        %v2013 = vrot.slane %v1982, 4
        %v2014 = vadd.f32 %v1982, %v2013
        %v2015 = vrot.slane %v2014, 2
        %v2016 = vadd.f32 %v2014, %v2015
        %v2017 = vrot.slane %v2016, 1
        %v2018 = vadd.f32 %v2016, %v2017
        %v2019 = vrot.slane %v1984, 4
        %v2020 = vadd.f32 %v1984, %v2019
        %v2021 = vrot.slane %v2020, 2
        %v2022 = vadd.f32 %v2020, %v2021
        %v2023 = vrot.slane %v2022, 1
        %v2024 = vadd.f32 %v2022, %v2023
        %v2025 = vrot.slane %v1986, 4
        %v2026 = vadd.f32 %v1986, %v2025
        %v2027 = vrot.slane %v2026, 2
        %v2028 = vadd.f32 %v2026, %v2027
        %v2029 = vrot.slane %v2028, 1
        %v2030 = vadd.f32 %v2028, %v2029
        %v2031 = vrot.slane %v1988, 4
        %v2032 = vadd.f32 %v1988, %v2031
        %v2033 = vrot.slane %v2032, 2
        %v2034 = vadd.f32 %v2032, %v2033
        %v2035 = vrot.slane %v2034, 1
        %v2036 = vadd.f32 %v2034, %v2035
        %v2037 = vlog2.pop %v1994
        %v2038 = vmul.f32 %v2037, 0.6931472
        %v2039 = vlog2.pop %v2000
        %v2040 = vmul.f32 %v2039, 0.6931472
        %v2041 = vlog2.pop %v2006
        %v2042 = vmul.f32 %v2041, 0.6931472
        %v2043 = vlog2.pop %v2012
        %v2044 = vmul.f32 %v2043, 0.6931472
        %v2045 = vlog2.pop %v2018
        %v2046 = vmul.f32 %v2045, 0.6931472
        %v2047 = vlog2.pop %v2024
        %v2048 = vmul.f32 %v2047, 0.6931472
        %v2049 = vlog2.pop %v2030
        %v2050 = vmul.f32 %v2049, 0.6931472
        %v2051 = vlog2.pop %v2036
        %v2052 = vmul.f32 %v2051, 0.6931472
        %v2053 = vadd.f32 %v2038, %v1922
        %v2054 = vadd.f32 %v2040, %v1928
        %v2055 = vadd.f32 %v2042, %v1934
        %v2056 = vadd.f32 %v2044, %v1940
        %v2057 = vadd.f32 %v2046, %v1946
        %v2058 = vadd.f32 %v2048, %v1952
        %v2059 = vadd.f32 %v2050, %v1958
        %v2060 = vadd.f32 %v2052, %v1964
        %v2062 = vrot.slane %v1798, 1
        %v2063 = vrot.slane %v1798, 2
        %v2064 = vrot.slane %v1798, 3
        %v2065 = vrot.slane %v1798, 4
        %v2066 = vrot.slane %v1798, 5
        %v2067 = vrot.slane %v1798, 6
        %v2068 = vrot.slane %v1798, 7
        %v2077 = vadd.f32 %v2053, %v1798
        %v2078 = vadd.f32 %v2054, %v2062
        %v2079 = vadd.f32 %v2055, %v2063
        %v2080 = vadd.f32 %v2056, %v2064
        %v2081 = vadd.f32 %v2057, %v2065
        %v2082 = vadd.f32 %v2058, %v2066
        %v2083 = vadd.f32 %v2059, %v2067
        %v2084 = vadd.f32 %v2060, %v2068
        %s2085 = scalar_lea.vmem %s230, 96 [#allocation2]
        %v2086 = vld [vmem:[%s2085] sm:$0xf]
        %v2087 = vld [vmem:[%s2085 + $0x4] sm:$0xf]
        %v2088 = vld [vmem:[%s2085 + $0x8] sm:$0xf]
        %v2089 = vld [vmem:[%s2085 + $0xc] sm:$0xf]
        %v2094 = vunpack.c.l.b16 %v2086
        %v2095 = vunpack.c.l.b16 %v2087
        %v2096 = vunpack.c.l.b16 %v2088
        %v2097 = vunpack.c.l.b16 %v2089
        %v2098 = vpack.c.b16 %v2095, %v2094
        %v2099 = vpack.c.b16 %v2097, %v2096
        %2102 = vmatprep.subr.bf16.mxu0 0
        %2103 = vmatpush1.bf16.msra.mxu0 0
        %2104 = vmatprep.subr.bf16.mxu0 0
        %2105 = vmatpush1.bf16.msra.mxu0 0
        %2106 = vmatprep.subr.bf16.mxu0 0
        %2107 = vmatpush1.bf16.msra.mxu0 0
        %2108 = vmatprep.subr.bf16.mxu0 0
        %2109 = vmatpush1.bf16.msra.mxu0 0
        %2110 = vmatprep.subr.bf16.mxu0 0
        %2111 = vmatpush1.bf16.msra.mxu0 0
        %2112 = vmatprep.subr.bf16.mxu0 0
        %2113 = vmatpush1.bf16.msra.mxu0 0
        %2114 = vmatprep.subr.bf16.mxu0 0
        %2115 = vmatpush1.bf16.msra.mxu0 %v2099
        %2116 = vmatprep.subr.bf16.mxu0 0
        %2117 = vmatpush1.bf16.msra.mxu0 %v2098
        %2118 = vmatprep.subr.bf16.mxu0 0
        %2119 = vmatpush2.bf16.msra.mxu0 0
        %2120 = vmatprep.subr.bf16.mxu0 0
        %2121 = vmatpush2.bf16.msra.mxu0 0
        %2122 = vmatprep.subr.bf16.mxu0 0
        %2123 = vmatpush2.bf16.msra.mxu0 0
        %2124 = vmatprep.subr.bf16.mxu0 0
        %2125 = vmatpush2.bf16.msra.mxu0 0
        %2126 = vmatprep.subr.bf16.mxu0 0
        %2127 = vmatpush2.bf16.msra.mxu0 0
        %2128 = vmatprep.subr.bf16.mxu0 0
        %2129 = vmatpush2.bf16.msra.mxu0 0
        %2130 = vmatprep.subr.bf16.mxu0 0
        %2131 = vmatpush2.bf16.msra.mxu0 0
        %2132 = vmatprep.subr.bf16.mxu0 0
        %2133 = vmatpush2.bf16.msra.mxu0 0
        %2134 = vmatprep.mubr.bf16.mxu0 0
        %2135 = vmatmul.mubr.bf16.gmra.mxu0 %v355
        %v2136 = vpop.f32.mrf.mxu0
        %v2137 = vadd.f32 0.0, %v2136
        %v2138 = vpop.f32.mrf.mxu0
        %v2139 = vpop.f32.mrf.mxu0
        %v2140 = vpop.f32.mrf.mxu0
        %2141 = vdwg.mxu0
        %v2142 = vld [vmem:[%s239 + $0x6] sm:$0x1]
        %v2143 = vlaneseq
        %v2144 = vshrl.u32 %v2143, 7
        %v2145 = vsub.s32 0, %v2144
        %v2146 = vrot.slane %v2142, %v2145
        %vm2147 = vcmp.eq.s32.totalorder %v336, %v2146
        %v2148 = vsel %vm2147, 1, 0
        %v2149 = vcvt.s32.f32 %v2148
        %v2150 = vmul.f32 %v285, %v1810
        %v2151 = vmul.f32 %v292, %v1810
        %v2152 = vmul.f32 %v299, %v1810
        %v2153 = vmul.f32 %v306, %v1810
        %v2154 = vmul.f32 %v313, %v1810
        %v2155 = vmul.f32 %v320, %v1810
        %v2156 = vmul.f32 %v327, %v1810
        %v2157 = vmul.f32 %v334, %v1810
        %v2158 = vrot.slane %v2150, 4
        %v2159 = vadd.f32 %v2150, %v2158
        %v2160 = vrot.slane %v2159, 2
        %v2161 = vadd.f32 %v2159, %v2160
        %v2162 = vrot.slane %v2161, 1
        %v2163 = vadd.f32 %v2161, %v2162
        %v2164 = vrot.slane %v2151, 4
        %v2165 = vadd.f32 %v2151, %v2164
        %v2166 = vrot.slane %v2165, 2
        %v2167 = vadd.f32 %v2165, %v2166
        %v2168 = vrot.slane %v2167, 1
        %v2169 = vadd.f32 %v2167, %v2168
        %v2170 = vrot.slane %v2152, 4
        %v2171 = vadd.f32 %v2152, %v2170
        %v2172 = vrot.slane %v2171, 2
        %v2173 = vadd.f32 %v2171, %v2172
        %v2174 = vrot.slane %v2173, 1
        %v2175 = vadd.f32 %v2173, %v2174
        %v2176 = vrot.slane %v2153, 4
        %v2177 = vadd.f32 %v2153, %v2176
        %v2178 = vrot.slane %v2177, 2
        %v2179 = vadd.f32 %v2177, %v2178
        %v2180 = vrot.slane %v2179, 1
        %v2181 = vadd.f32 %v2179, %v2180
        %v2182 = vrot.slane %v2154, 4
        %v2183 = vadd.f32 %v2154, %v2182
        %v2184 = vrot.slane %v2183, 2
        %v2185 = vadd.f32 %v2183, %v2184
        %v2186 = vrot.slane %v2185, 1
        %v2187 = vadd.f32 %v2185, %v2186
        %v2188 = vrot.slane %v2155, 4
        %v2189 = vadd.f32 %v2155, %v2188
        %v2190 = vrot.slane %v2189, 2
        %v2191 = vadd.f32 %v2189, %v2190
        %v2192 = vrot.slane %v2191, 1
        %v2193 = vadd.f32 %v2191, %v2192
        %v2194 = vrot.slane %v2156, 4
        %v2195 = vadd.f32 %v2156, %v2194
        %v2196 = vrot.slane %v2195, 2
        %v2197 = vadd.f32 %v2195, %v2196
        %v2198 = vrot.slane %v2197, 1
        %v2199 = vadd.f32 %v2197, %v2198
        %v2200 = vrot.slane %v2157, 4
        %v2201 = vadd.f32 %v2157, %v2200
        %v2202 = vrot.slane %v2201, 2
        %v2203 = vadd.f32 %v2201, %v2202
        %v2204 = vrot.slane %v2203, 1
        %v2205 = vadd.f32 %v2203, %v2204
        %v2214 = vsel %vm535, %v2169, %v2163
        %v2215 = vsel %vm537, %v2175, %v2214
        %v2216 = vsel %vm539, %v2181, %v2215
        %v2217 = vsel %vm541, %v2187, %v2216
        %v2218 = vsel %vm543, %v2193, %v2217
        %v2219 = vsel %vm545, %v2199, %v2218
        %v2220 = vsel %vm547, %v2205, %v2219
        %v2222 = vadd.f32 %v2137, %v2220
        %v2223 = vmul.f32 %v2222, %v2149
        %v2224 = vadd.f32 %v1885, %v2223
        %v2233 = vrot.slane %v2078, 7
        %v2234 = vsel %vm535, %v2233, %v2077
        %v2235 = vrot.slane %v2079, 6
        %v2236 = vsel %vm537, %v2235, %v2234
        %v2237 = vrot.slane %v2080, 5
        %v2238 = vsel %vm539, %v2237, %v2236
        %v2239 = vrot.slane %v2081, 4
        %v2240 = vsel %vm541, %v2239, %v2238
        %v2241 = vrot.slane %v2082, 3
        %v2242 = vsel %vm543, %v2241, %v2240
        %v2243 = vrot.slane %v2083, 2
        %v2244 = vsel %vm545, %v2243, %v2242
        %v2245 = vrot.slane %v2084, 1
        %v2246 = vsel %vm547, %v2245, %v2244
        %v2248 = vadd.f32 %v285, %v2246
        %v2249 = vadd.f32 %v292, %v2246
        %v2250 = vadd.f32 %v299, %v2246
        %v2251 = vadd.f32 %v306, %v2246
        %v2252 = vadd.f32 %v313, %v2246
        %v2253 = vadd.f32 %v320, %v2246
        %v2254 = vadd.f32 %v327, %v2246
        %v2255 = vadd.f32 %v334, %v2246
        %v2256 = vrot.slane %v2248, 4
        %v2257 = vmax.f32 %v2248, %v2256
        %v2258 = vrot.slane %v2257, 2
        %v2259 = vmax.f32 %v2257, %v2258
        %v2260 = vrot.slane %v2259, 1
        %v2261 = vmax.f32 %v2259, %v2260
        %v2262 = vrot.slane %v2249, 4
        %v2263 = vmax.f32 %v2249, %v2262
        %v2264 = vrot.slane %v2263, 2
        %v2265 = vmax.f32 %v2263, %v2264
        %v2266 = vrot.slane %v2265, 1
        %v2267 = vmax.f32 %v2265, %v2266
        %v2268 = vrot.slane %v2250, 4
        %v2269 = vmax.f32 %v2250, %v2268
        %v2270 = vrot.slane %v2269, 2
        %v2271 = vmax.f32 %v2269, %v2270
        %v2272 = vrot.slane %v2271, 1
        %v2273 = vmax.f32 %v2271, %v2272
        %v2274 = vrot.slane %v2251, 4
        %v2275 = vmax.f32 %v2251, %v2274
        %v2276 = vrot.slane %v2275, 2
        %v2277 = vmax.f32 %v2275, %v2276
        %v2278 = vrot.slane %v2277, 1
        %v2279 = vmax.f32 %v2277, %v2278
        %v2280 = vrot.slane %v2252, 4
        %v2281 = vmax.f32 %v2252, %v2280
        %v2282 = vrot.slane %v2281, 2
        %v2283 = vmax.f32 %v2281, %v2282
        %v2284 = vrot.slane %v2283, 1
        %v2285 = vmax.f32 %v2283, %v2284
        %v2286 = vrot.slane %v2253, 4
        %v2287 = vmax.f32 %v2253, %v2286
        %v2288 = vrot.slane %v2287, 2
        %v2289 = vmax.f32 %v2287, %v2288
        %v2290 = vrot.slane %v2289, 1
        %v2291 = vmax.f32 %v2289, %v2290
        %v2292 = vrot.slane %v2254, 4
        %v2293 = vmax.f32 %v2254, %v2292
        %v2294 = vrot.slane %v2293, 2
        %v2295 = vmax.f32 %v2293, %v2294
        %v2296 = vrot.slane %v2295, 1
        %v2297 = vmax.f32 %v2295, %v2296
        %v2298 = vrot.slane %v2255, 4
        %v2299 = vmax.f32 %v2255, %v2298
        %v2300 = vrot.slane %v2299, 2
        %v2301 = vmax.f32 %v2299, %v2300
        %v2302 = vrot.slane %v2301, 1
        %v2303 = vmax.f32 %v2301, %v2302
        %v2304 = vsub.f32 %v2248, %v2261
        %v2305 = vsub.f32 %v2249, %v2267
        %v2306 = vsub.f32 %v2250, %v2273
        %v2307 = vsub.f32 %v2251, %v2279
        %v2308 = vsub.f32 %v2252, %v2285
        %v2309 = vsub.f32 %v2253, %v2291
        %v2310 = vsub.f32 %v2254, %v2297
        %v2311 = vsub.f32 %v2255, %v2303
        %v2312 = vmul.f32 %v2304, 1.442695
        %v2313 = vpow.pop %v2312
        %v2314 = vmul.f32 %v2305, 1.442695
        %v2315 = vpow.pop %v2314
        %v2316 = vmul.f32 %v2306, 1.442695
        %v2317 = vpow.pop %v2316
        %v2318 = vmul.f32 %v2307, 1.442695
        %v2319 = vpow.pop %v2318
        %v2320 = vmul.f32 %v2308, 1.442695
        %v2321 = vpow.pop %v2320
        %v2322 = vmul.f32 %v2309, 1.442695
        %v2323 = vpow.pop %v2322
        %v2324 = vmul.f32 %v2310, 1.442695
        %v2325 = vpow.pop %v2324
        %v2326 = vmul.f32 %v2311, 1.442695
        %v2327 = vpow.pop %v2326
        %v2328 = vrot.slane %v2313, 4
        %v2329 = vadd.f32 %v2313, %v2328
        %v2330 = vrot.slane %v2329, 2
        %v2331 = vadd.f32 %v2329, %v2330
        %v2332 = vrot.slane %v2331, 1
        %v2333 = vadd.f32 %v2331, %v2332
        %v2334 = vrot.slane %v2315, 4
        %v2335 = vadd.f32 %v2315, %v2334
        %v2336 = vrot.slane %v2335, 2
        %v2337 = vadd.f32 %v2335, %v2336
        %v2338 = vrot.slane %v2337, 1
        %v2339 = vadd.f32 %v2337, %v2338
        %v2340 = vrot.slane %v2317, 4
        %v2341 = vadd.f32 %v2317, %v2340
        %v2342 = vrot.slane %v2341, 2
        %v2343 = vadd.f32 %v2341, %v2342
        %v2344 = vrot.slane %v2343, 1
        %v2345 = vadd.f32 %v2343, %v2344
        %v2346 = vrot.slane %v2319, 4
        %v2347 = vadd.f32 %v2319, %v2346
        %v2348 = vrot.slane %v2347, 2
        %v2349 = vadd.f32 %v2347, %v2348
        %v2350 = vrot.slane %v2349, 1
        %v2351 = vadd.f32 %v2349, %v2350
        %v2352 = vrot.slane %v2321, 4
        %v2353 = vadd.f32 %v2321, %v2352
        %v2354 = vrot.slane %v2353, 2
        %v2355 = vadd.f32 %v2353, %v2354
        %v2356 = vrot.slane %v2355, 1
        %v2357 = vadd.f32 %v2355, %v2356
        %v2358 = vrot.slane %v2323, 4
        %v2359 = vadd.f32 %v2323, %v2358
        %v2360 = vrot.slane %v2359, 2
        %v2361 = vadd.f32 %v2359, %v2360
        %v2362 = vrot.slane %v2361, 1
        %v2363 = vadd.f32 %v2361, %v2362
        %v2364 = vrot.slane %v2325, 4
        %v2365 = vadd.f32 %v2325, %v2364
        %v2366 = vrot.slane %v2365, 2
        %v2367 = vadd.f32 %v2365, %v2366
        %v2368 = vrot.slane %v2367, 1
        %v2369 = vadd.f32 %v2367, %v2368
        %v2370 = vrot.slane %v2327, 4
        %v2371 = vadd.f32 %v2327, %v2370
        %v2372 = vrot.slane %v2371, 2
        %v2373 = vadd.f32 %v2371, %v2372
        %v2374 = vrot.slane %v2373, 1
        %v2375 = vadd.f32 %v2373, %v2374
        %v2376 = vlog2.pop %v2333
        %v2377 = vmul.f32 %v2376, 0.6931472
        %v2378 = vlog2.pop %v2339
        %v2379 = vmul.f32 %v2378, 0.6931472
        %v2380 = vlog2.pop %v2345
        %v2381 = vmul.f32 %v2380, 0.6931472
        %v2382 = vlog2.pop %v2351
        %v2383 = vmul.f32 %v2382, 0.6931472
        %v2384 = vlog2.pop %v2357
        %v2385 = vmul.f32 %v2384, 0.6931472
        %v2386 = vlog2.pop %v2363
        %v2387 = vmul.f32 %v2386, 0.6931472
        %v2388 = vlog2.pop %v2369
        %v2389 = vmul.f32 %v2388, 0.6931472
        %v2390 = vlog2.pop %v2375
        %v2391 = vmul.f32 %v2390, 0.6931472
        %v2392 = vadd.f32 %v2377, %v2261
        %v2393 = vadd.f32 %v2379, %v2267
        %v2394 = vadd.f32 %v2381, %v2273
        %v2395 = vadd.f32 %v2383, %v2279
        %v2396 = vadd.f32 %v2385, %v2285
        %v2397 = vadd.f32 %v2387, %v2291
        %v2398 = vadd.f32 %v2389, %v2297
        %v2399 = vadd.f32 %v2391, %v2303
        %v2401 = vrot.slane %v2137, 1
        %v2402 = vrot.slane %v2137, 2
        %v2403 = vrot.slane %v2137, 3
        %v2404 = vrot.slane %v2137, 4
        %v2405 = vrot.slane %v2137, 5
        %v2406 = vrot.slane %v2137, 6
        %v2407 = vrot.slane %v2137, 7
        %v2416 = vadd.f32 %v2392, %v2137
        %v2417 = vadd.f32 %v2393, %v2401
        %v2418 = vadd.f32 %v2394, %v2402
        %v2419 = vadd.f32 %v2395, %v2403
        %v2420 = vadd.f32 %v2396, %v2404
        %v2421 = vadd.f32 %v2397, %v2405
        %v2422 = vadd.f32 %v2398, %v2406
        %v2423 = vadd.f32 %v2399, %v2407
        %s2424 = scalar_lea.vmem %s230, 112 [#allocation2]
        %v2425 = vld [vmem:[%s2424] sm:$0xf]
        %v2426 = vld [vmem:[%s2424 + $0x4] sm:$0xf]
        %v2427 = vld [vmem:[%s2424 + $0x8] sm:$0xf]
        %v2428 = vld [vmem:[%s2424 + $0xc] sm:$0xf]
        %v2433 = vunpack.c.l.b16 %v2425
        %v2434 = vunpack.c.l.b16 %v2426
        %v2435 = vunpack.c.l.b16 %v2427
        %v2436 = vunpack.c.l.b16 %v2428
        %v2437 = vpack.c.b16 %v2434, %v2433
        %v2438 = vpack.c.b16 %v2436, %v2435
        %2441 = vmatprep.subr.bf16.mxu0 0
        %2442 = vmatpush1.bf16.msra.mxu0 0
        %2443 = vmatprep.subr.bf16.mxu0 0
        %2444 = vmatpush1.bf16.msra.mxu0 0
        %2445 = vmatprep.subr.bf16.mxu0 0
        %2446 = vmatpush1.bf16.msra.mxu0 0
        %2447 = vmatprep.subr.bf16.mxu0 0
        %2448 = vmatpush1.bf16.msra.mxu0 0
        %2449 = vmatprep.subr.bf16.mxu0 0
        %2450 = vmatpush1.bf16.msra.mxu0 0
        %2451 = vmatprep.subr.bf16.mxu0 0
        %2452 = vmatpush1.bf16.msra.mxu0 0
        %2453 = vmatprep.subr.bf16.mxu0 0
        %2454 = vmatpush1.bf16.msra.mxu0 %v2438
        %2455 = vmatprep.subr.bf16.mxu0 0
        %2456 = vmatpush1.bf16.msra.mxu0 %v2437
        %2457 = vmatprep.subr.bf16.mxu0 0
        %2458 = vmatpush2.bf16.msra.mxu0 0
        %2459 = vmatprep.subr.bf16.mxu0 0
        %2460 = vmatpush2.bf16.msra.mxu0 0
        %2461 = vmatprep.subr.bf16.mxu0 0
        %2462 = vmatpush2.bf16.msra.mxu0 0
        %2463 = vmatprep.subr.bf16.mxu0 0
        %2464 = vmatpush2.bf16.msra.mxu0 0
        %2465 = vmatprep.subr.bf16.mxu0 0
        %2466 = vmatpush2.bf16.msra.mxu0 0
        %2467 = vmatprep.subr.bf16.mxu0 0
        %2468 = vmatpush2.bf16.msra.mxu0 0
        %2469 = vmatprep.subr.bf16.mxu0 0
        %2470 = vmatpush2.bf16.msra.mxu0 0
        %2471 = vmatprep.subr.bf16.mxu0 0
        %2472 = vmatpush2.bf16.msra.mxu0 0
        %2473 = vmatprep.mubr.bf16.mxu0 0
        %2474 = vmatmul.mubr.bf16.gmra.mxu0 %v355
        %v2475 = vpop.f32.mrf.mxu0
        %v2476 = vadd.f32 0.0, %v2475
        %v2477 = vpop.f32.mrf.mxu0
        %v2478 = vpop.f32.mrf.mxu0
        %v2479 = vpop.f32.mrf.mxu0
        %2480 = vdwg.mxu0
        %v2481 = vld [vmem:[%s239 + $0x7] sm:$0x1]
        %v2482 = vlaneseq
        %v2483 = vshrl.u32 %v2482, 7
        %v2484 = vsub.s32 0, %v2483
        %v2485 = vrot.slane %v2481, %v2484
        %vm2486 = vcmp.eq.s32.totalorder %v336, %v2485
        %v2487 = vsel %vm2486, 1, 0
        %v2488 = vcvt.s32.f32 %v2487
        %v2489 = vmul.f32 %v285, %v2149
        %v2490 = vmul.f32 %v292, %v2149
        %v2491 = vmul.f32 %v299, %v2149
        %v2492 = vmul.f32 %v306, %v2149
        %v2493 = vmul.f32 %v313, %v2149
        %v2494 = vmul.f32 %v320, %v2149
        %v2495 = vmul.f32 %v327, %v2149
        %v2496 = vmul.f32 %v334, %v2149
        %v2497 = vrot.slane %v2489, 4
        %v2498 = vadd.f32 %v2489, %v2497
        %v2499 = vrot.slane %v2498, 2
        %v2500 = vadd.f32 %v2498, %v2499
        %v2501 = vrot.slane %v2500, 1
        %v2502 = vadd.f32 %v2500, %v2501
        %v2503 = vrot.slane %v2490, 4
        %v2504 = vadd.f32 %v2490, %v2503
        %v2505 = vrot.slane %v2504, 2
        %v2506 = vadd.f32 %v2504, %v2505
        %v2507 = vrot.slane %v2506, 1
        %v2508 = vadd.f32 %v2506, %v2507
        %v2509 = vrot.slane %v2491, 4
        %v2510 = vadd.f32 %v2491, %v2509
        %v2511 = vrot.slane %v2510, 2
        %v2512 = vadd.f32 %v2510, %v2511
        %v2513 = vrot.slane %v2512, 1
        %v2514 = vadd.f32 %v2512, %v2513
        %v2515 = vrot.slane %v2492, 4
        %v2516 = vadd.f32 %v2492, %v2515
        %v2517 = vrot.slane %v2516, 2
        %v2518 = vadd.f32 %v2516, %v2517
        %v2519 = vrot.slane %v2518, 1
        %v2520 = vadd.f32 %v2518, %v2519
        %v2521 = vrot.slane %v2493, 4
        %v2522 = vadd.f32 %v2493, %v2521
        %v2523 = vrot.slane %v2522, 2
        %v2524 = vadd.f32 %v2522, %v2523
        %v2525 = vrot.slane %v2524, 1
        %v2526 = vadd.f32 %v2524, %v2525
        %v2527 = vrot.slane %v2494, 4
        %v2528 = vadd.f32 %v2494, %v2527
        %v2529 = vrot.slane %v2528, 2
        %v2530 = vadd.f32 %v2528, %v2529
        %v2531 = vrot.slane %v2530, 1
        %v2532 = vadd.f32 %v2530, %v2531
        %v2533 = vrot.slane %v2495, 4
        %v2534 = vadd.f32 %v2495, %v2533
        %v2535 = vrot.slane %v2534, 2
        %v2536 = vadd.f32 %v2534, %v2535
        %v2537 = vrot.slane %v2536, 1
        %v2538 = vadd.f32 %v2536, %v2537
        %v2539 = vrot.slane %v2496, 4
        %v2540 = vadd.f32 %v2496, %v2539
        %v2541 = vrot.slane %v2540, 2
        %v2542 = vadd.f32 %v2540, %v2541
        %v2543 = vrot.slane %v2542, 1
        %v2544 = vadd.f32 %v2542, %v2543
        %v2553 = vsel %vm535, %v2508, %v2502
        %v2554 = vsel %vm537, %v2514, %v2553
        %v2555 = vsel %vm539, %v2520, %v2554
        %v2556 = vsel %vm541, %v2526, %v2555
        %v2557 = vsel %vm543, %v2532, %v2556
        %v2558 = vsel %vm545, %v2538, %v2557
        %v2559 = vsel %vm547, %v2544, %v2558
        %v2561 = vadd.f32 %v2476, %v2559
        %v2562 = vmul.f32 %v2561, %v2488
        %v2563 = vadd.f32 %v2224, %v2562
        %v2572 = vrot.slane %v2417, 7
        %v2573 = vsel %vm535, %v2572, %v2416
        %v2574 = vrot.slane %v2418, 6
        %v2575 = vsel %vm537, %v2574, %v2573
        %v2576 = vrot.slane %v2419, 5
        %v2577 = vsel %vm539, %v2576, %v2575
        %v2578 = vrot.slane %v2420, 4
        %v2579 = vsel %vm541, %v2578, %v2577
        %v2580 = vrot.slane %v2421, 3
        %v2581 = vsel %vm543, %v2580, %v2579
        %v2582 = vrot.slane %v2422, 2
        %v2583 = vsel %vm545, %v2582, %v2581
        %v2584 = vrot.slane %v2423, 1
        %v2585 = vsel %vm547, %v2584, %v2583
        %v2587 = vadd.f32 %v285, %v2585
        %v2588 = vadd.f32 %v292, %v2585
        %v2589 = vadd.f32 %v299, %v2585
        %v2590 = vadd.f32 %v306, %v2585
        %v2591 = vadd.f32 %v313, %v2585
        %v2592 = vadd.f32 %v320, %v2585
        %v2593 = vadd.f32 %v327, %v2585
        %v2594 = vadd.f32 %v334, %v2585
        %v2595 = vrot.slane %v2587, 4
        %v2596 = vmax.f32 %v2587, %v2595
        %v2597 = vrot.slane %v2596, 2
        %v2598 = vmax.f32 %v2596, %v2597
        %v2599 = vrot.slane %v2598, 1
        %v2600 = vmax.f32 %v2598, %v2599
        %v2601 = vrot.slane %v2588, 4
        %v2602 = vmax.f32 %v2588, %v2601
        %v2603 = vrot.slane %v2602, 2
        %v2604 = vmax.f32 %v2602, %v2603
        %v2605 = vrot.slane %v2604, 1
        %v2606 = vmax.f32 %v2604, %v2605
        %v2607 = vrot.slane %v2589, 4
        %v2608 = vmax.f32 %v2589, %v2607
        %v2609 = vrot.slane %v2608, 2
        %v2610 = vmax.f32 %v2608, %v2609
        %v2611 = vrot.slane %v2610, 1
        %v2612 = vmax.f32 %v2610, %v2611
        %v2613 = vrot.slane %v2590, 4
        %v2614 = vmax.f32 %v2590, %v2613
        %v2615 = vrot.slane %v2614, 2
        %v2616 = vmax.f32 %v2614, %v2615
        %v2617 = vrot.slane %v2616, 1
        %v2618 = vmax.f32 %v2616, %v2617
        %v2619 = vrot.slane %v2591, 4
        %v2620 = vmax.f32 %v2591, %v2619
        %v2621 = vrot.slane %v2620, 2
        %v2622 = vmax.f32 %v2620, %v2621
        %v2623 = vrot.slane %v2622, 1
        %v2624 = vmax.f32 %v2622, %v2623
        %v2625 = vrot.slane %v2592, 4
        %v2626 = vmax.f32 %v2592, %v2625
        %v2627 = vrot.slane %v2626, 2
        %v2628 = vmax.f32 %v2626, %v2627
        %v2629 = vrot.slane %v2628, 1
        %v2630 = vmax.f32 %v2628, %v2629
        %v2631 = vrot.slane %v2593, 4
        %v2632 = vmax.f32 %v2593, %v2631
        %v2633 = vrot.slane %v2632, 2
        %v2634 = vmax.f32 %v2632, %v2633
        %v2635 = vrot.slane %v2634, 1
        %v2636 = vmax.f32 %v2634, %v2635
        %v2637 = vrot.slane %v2594, 4
        %v2638 = vmax.f32 %v2594, %v2637
        %v2639 = vrot.slane %v2638, 2
        %v2640 = vmax.f32 %v2638, %v2639
        %v2641 = vrot.slane %v2640, 1
        %v2642 = vmax.f32 %v2640, %v2641
        %v2643 = vsub.f32 %v2587, %v2600
        %v2644 = vsub.f32 %v2588, %v2606
        %v2645 = vsub.f32 %v2589, %v2612
        %v2646 = vsub.f32 %v2590, %v2618
        %v2647 = vsub.f32 %v2591, %v2624
        %v2648 = vsub.f32 %v2592, %v2630
        %v2649 = vsub.f32 %v2593, %v2636
        %v2650 = vsub.f32 %v2594, %v2642
        %v2651 = vmul.f32 %v2643, 1.442695
        %v2652 = vpow.pop %v2651
        %v2653 = vmul.f32 %v2644, 1.442695
        %v2654 = vpow.pop %v2653
        %v2655 = vmul.f32 %v2645, 1.442695
        %v2656 = vpow.pop %v2655
        %v2657 = vmul.f32 %v2646, 1.442695
        %v2658 = vpow.pop %v2657
        %v2659 = vmul.f32 %v2647, 1.442695
        %v2660 = vpow.pop %v2659
        %v2661 = vmul.f32 %v2648, 1.442695
        %v2662 = vpow.pop %v2661
        %v2663 = vmul.f32 %v2649, 1.442695
        %v2664 = vpow.pop %v2663
        %v2665 = vmul.f32 %v2650, 1.442695
        %v2666 = vpow.pop %v2665
        %v2667 = vrot.slane %v2652, 4
        %v2668 = vadd.f32 %v2652, %v2667
        %v2669 = vrot.slane %v2668, 2
        %v2670 = vadd.f32 %v2668, %v2669
        %v2671 = vrot.slane %v2670, 1
        %v2672 = vadd.f32 %v2670, %v2671
        %v2673 = vrot.slane %v2654, 4
        %v2674 = vadd.f32 %v2654, %v2673
        %v2675 = vrot.slane %v2674, 2
        %v2676 = vadd.f32 %v2674, %v2675
        %v2677 = vrot.slane %v2676, 1
        %v2678 = vadd.f32 %v2676, %v2677
        %v2679 = vrot.slane %v2656, 4
        %v2680 = vadd.f32 %v2656, %v2679
        %v2681 = vrot.slane %v2680, 2
        %v2682 = vadd.f32 %v2680, %v2681
        %v2683 = vrot.slane %v2682, 1
        %v2684 = vadd.f32 %v2682, %v2683
        %v2685 = vrot.slane %v2658, 4
        %v2686 = vadd.f32 %v2658, %v2685
        %v2687 = vrot.slane %v2686, 2
        %v2688 = vadd.f32 %v2686, %v2687
        %v2689 = vrot.slane %v2688, 1
        %v2690 = vadd.f32 %v2688, %v2689
        %v2691 = vrot.slane %v2660, 4
        %v2692 = vadd.f32 %v2660, %v2691
        %v2693 = vrot.slane %v2692, 2
        %v2694 = vadd.f32 %v2692, %v2693
        %v2695 = vrot.slane %v2694, 1
        %v2696 = vadd.f32 %v2694, %v2695
        %v2697 = vrot.slane %v2662, 4
        %v2698 = vadd.f32 %v2662, %v2697
        %v2699 = vrot.slane %v2698, 2
        %v2700 = vadd.f32 %v2698, %v2699
        %v2701 = vrot.slane %v2700, 1
        %v2702 = vadd.f32 %v2700, %v2701
        %v2703 = vrot.slane %v2664, 4
        %v2704 = vadd.f32 %v2664, %v2703
        %v2705 = vrot.slane %v2704, 2
        %v2706 = vadd.f32 %v2704, %v2705
        %v2707 = vrot.slane %v2706, 1
        %v2708 = vadd.f32 %v2706, %v2707
        %v2709 = vrot.slane %v2666, 4
        %v2710 = vadd.f32 %v2666, %v2709
        %v2711 = vrot.slane %v2710, 2
        %v2712 = vadd.f32 %v2710, %v2711
        %v2713 = vrot.slane %v2712, 1
        %v2714 = vadd.f32 %v2712, %v2713
        %v2715 = vlog2.pop %v2672
        %v2716 = vmul.f32 %v2715, 0.6931472
        %v2717 = vlog2.pop %v2678
        %v2718 = vmul.f32 %v2717, 0.6931472
        %v2719 = vlog2.pop %v2684
        %v2720 = vmul.f32 %v2719, 0.6931472
        %v2721 = vlog2.pop %v2690
        %v2722 = vmul.f32 %v2721, 0.6931472
        %v2723 = vlog2.pop %v2696
        %v2724 = vmul.f32 %v2723, 0.6931472
        %v2725 = vlog2.pop %v2702
        %v2726 = vmul.f32 %v2725, 0.6931472
        %v2727 = vlog2.pop %v2708
        %v2728 = vmul.f32 %v2727, 0.6931472
        %v2729 = vlog2.pop %v2714
        %v2730 = vmul.f32 %v2729, 0.6931472
        %v2731 = vadd.f32 %v2716, %v2600
        %v2732 = vadd.f32 %v2718, %v2606
        %v2733 = vadd.f32 %v2720, %v2612
        %v2734 = vadd.f32 %v2722, %v2618
        %v2735 = vadd.f32 %v2724, %v2624
        %v2736 = vadd.f32 %v2726, %v2630
        %v2737 = vadd.f32 %v2728, %v2636
        %v2738 = vadd.f32 %v2730, %v2642
        %v2740 = vrot.slane %v2476, 1
        %v2741 = vrot.slane %v2476, 2
        %v2742 = vrot.slane %v2476, 3
        %v2743 = vrot.slane %v2476, 4
        %v2744 = vrot.slane %v2476, 5
        %v2745 = vrot.slane %v2476, 6
        %v2746 = vrot.slane %v2476, 7
        %v2755 = vadd.f32 %v2731, %v2476
        %v2756 = vadd.f32 %v2732, %v2740
        %v2757 = vadd.f32 %v2733, %v2741
        %v2758 = vadd.f32 %v2734, %v2742
        %v2759 = vadd.f32 %v2735, %v2743
        %v2760 = vadd.f32 %v2736, %v2744
        %v2761 = vadd.f32 %v2737, %v2745
        %v2762 = vadd.f32 %v2738, %v2746
        %v2763 = vrot.slane %v2563, 4
        %v2764 = vadd.f32 %v2563, %v2763
        %v2765 = vrot.slane %v2764, 2
        %v2766 = vadd.f32 %v2764, %v2765
        %v2767 = vrot.slane %v2766, 1
        %v2768 = vadd.f32 %v2766, %v2767
        %vm2769 = vcmask 1040384
        %v2770 = vsel %vm2769, %v2755, -inf
        %v2771 = vsel %vm2769, %v2756, -inf
        %v2772 = vsel %vm2769, %v2757, -inf
        %v2773 = vsel %vm2769, %v2758, -inf
        %v2774 = vsel %vm2769, %v2759, -inf
        %v2775 = vmax.f32 %v2770, %v2774
        %v2776 = vsel %vm2769, %v2760, -inf
        %v2777 = vmax.f32 %v2771, %v2776
        %v2778 = vsel %vm2769, %v2761, -inf
        %v2779 = vmax.f32 %v2772, %v2778
        %v2780 = vsel %vm2769, %v2762, -inf
        %v2781 = vmax.f32 %v2773, %v2780
        %v2782 = vmax.f32 %v2775, %v2777
        %v2783 = vmax.f32 %v2779, %v2781
        %v2784 = vmax.f32 %v2782, %v2783
        %v2785 = vlaneseq
        %v2786 = vshrl.u32 %v2785, 7
        %v2787 = vsub.s32 0, %v2786
        %v2788 = vrot.slane %v2784, %v2787
        %v2789 = vsub.f32 %v2755, %v2788
        %v2790 = vsub.f32 %v2756, %v2788
        %v2791 = vsub.f32 %v2757, %v2788
        %v2792 = vsub.f32 %v2758, %v2788
        %v2793 = vsub.f32 %v2759, %v2788
        %v2794 = vsub.f32 %v2760, %v2788
        %v2795 = vsub.f32 %v2761, %v2788
        %v2796 = vsub.f32 %v2762, %v2788
        %v2797 = vmul.f32 %v2789, 1.442695
        %v2798 = vpow.pop %v2797
        %v2799 = vmul.f32 %v2790, 1.442695
        %v2800 = vpow.pop %v2799
        %v2801 = vmul.f32 %v2791, 1.442695
        %v2802 = vpow.pop %v2801
        %v2803 = vmul.f32 %v2792, 1.442695
        %v2804 = vpow.pop %v2803
        %v2805 = vmul.f32 %v2793, 1.442695
        %v2806 = vpow.pop %v2805
        %v2807 = vmul.f32 %v2794, 1.442695
        %v2808 = vpow.pop %v2807
        %v2809 = vmul.f32 %v2795, 1.442695
        %v2810 = vpow.pop %v2809
        %v2811 = vmul.f32 %v2796, 1.442695
        %v2812 = vpow.pop %v2811
        %v2821 = vrot.slane %v2800, 7
        %v2822 = vsel %vm535, %v2821, %v2798
        %v2823 = vrot.slane %v2802, 6
        %v2824 = vsel %vm537, %v2823, %v2822
        %v2825 = vrot.slane %v2804, 5
        %v2826 = vsel %vm539, %v2825, %v2824
        %v2827 = vrot.slane %v2806, 4
        %v2828 = vsel %vm541, %v2827, %v2826
        %v2829 = vrot.slane %v2808, 3
        %v2830 = vsel %vm543, %v2829, %v2828
        %v2831 = vrot.slane %v2810, 2
        %v2832 = vsel %vm545, %v2831, %v2830
        %v2833 = vrot.slane %v2812, 1
        %v2834 = vsel %vm547, %v2833, %v2832
        %v2836 = vrot.slane %v2834, 4
        %v2837 = vadd.f32 %v2834, %v2836
        %v2838 = vrot.slane %v2837, 2
        %v2839 = vadd.f32 %v2837, %v2838
        %v2840 = vrot.slane %v2839, 1
        %v2841 = vadd.f32 %v2839, %v2840
        %v2842 = vlog2.pop %v2841
        %v2843 = vmul.f32 %v2842, 0.6931472
        %v2844 = vadd.f32 %v2843, %v2784
        %v2845 = vsub.f32 %v2844, %v2768
        %2846 = vst [vmem:[%s275] sm:$0x1] %v2845
        %s2847 = sand.u32 %s127, 1
        %s2848 = scalar_lea.sflag [#allocation4], %s2847
        %s2849 = sand.u32 %s127, 1
        %s2850 = scalar_lea.vmem [#allocation10], %s2849
        // Predicated region
        $region53: #{tpu_custom_call.1} parent=35 // pred_check
          %p2851 = pneg %p137
        $region54: #{tpu_custom_call.1} parent=35 // pred_check_branch
          %2853 = sbr.rel (%p2851) target = $region56
        $region55: #{tpu_custom_call.1} parent=35 // pred_region
          %s2855 = ssub.s32 16, 16
          %2856 = vsyncadd %s2848, %s2855
          %s2857 = smul.addr %s25, 16
          %s2858 = scalar_lea.hbm %s4, %s2857
          %s2860 = sshll.u32 %s2850, 4
          %s2861 = int_to_ptr.vmem [resolvable:$true] %s2860
          %2863 = dma.vmem_to_hbm [thread:$0]  %s2861, 16, %s2858, %s2848
        $region56: #{tpu_custom_call.1} parent=35 // pred_fallthru
          _
      $region36: #{tpu_custom_call.1} parent=5 // pred_fallthru
        _
      %p2864 = scmp.le.s32.totalorder 2, %s20
      // Predicated region
      $region57: #{tpu_custom_call.1} parent=5 // pred_check
        %p2865 = pneg %p2864
      $region58: #{tpu_custom_call.1} parent=5 // pred_check_branch
        %2867 = sbr.rel (%p2865) target = $region60
      $region59: #{tpu_custom_call.1} parent=5 // pred_region
        %s2868 = ssub.s32 %s20, 2
        // Predicated region
        $region61: #{tpu_custom_call.1} parent=59 // pred_check
          %p2869 = pneg %p143
        $region62: #{tpu_custom_call.1} parent=59 // pred_check_branch
          %2871 = sbr.rel (%p2869) target = $region64
        $region63: #{tpu_custom_call.1} parent=59 // pred_region
          %s2872 = sand.u32 %s128, 1
          %s2873 = scalar_lea.sflag [#allocation4], %s2872
          %s2874 = sand.u32 %s128, 1
          %s2875 = scalar_lea.vmem [#allocation10], %s2874
          %2876 = dma.done %s2873, 16
        $region64: #{tpu_custom_call.1} parent=59 // pred_fallthru
          _
      $region60: #{tpu_custom_call.1} parent=5 // pred_fallthru
        _
    $region6: #{tpu_custom_call.1} parent=1 // loop_footer
      %s24 = sadd.s32 1, %s20
    $region7: #{tpu_custom_call.1} parent=1 // loop_footer_branch
      %19 = sbr.rel target = $region3
    $region8: #{tpu_custom_call.1} parent=1 // loop_exit
      _
    %2877 = vsyncpa [#allocation3], 1
    %s2878 = scalar_lea.sflag [#allocation3], 1
    %2879 = vsyncpa %s2878, 1
    %2880 = vsyncpa [#allocation6], 1
    %s2881 = scalar_lea.sflag [#allocation6], 1
    %2882 = vsyncpa %s2881, 1
    %2883 = vsyncpa [#allocation9], 1
    %2884 = vsyncpa [#allocation4], 1
    %s2885 = scalar_lea.sflag [#allocation4], 1
    %2886 = vsyncpa %s2885, 1

</llo_original>
